<compile_context>
chip_gen: v7x
topology: tpu7x:2x2x1
jax: 0.10.0
libtpu: 0.0.40
codegen_flags: <defaults>
</compile_context>

<pallas_src>
import functools
import math

import jax
import jax.numpy as jnp
import numpy as np
from jax.experimental import pallas as pl
from jax.experimental.pallas import tpu as pltpu

NUM_HEADS = 8


def _mhsa_kernel(x_ref, wqkv_ref, bqkv_ref, wo_ref, bo_ref, o_ref, ctx_ref,
                 *, bb, L, H):
    """One grid step: `bb` batches x full sequence, fully fused MHSA."""
    E = wo_ref.shape[0]
    Dh = E // H
    scale = 1.0 / math.sqrt(Dh)

    # ---- fused QKV projection: one bf16 MXU matmul, f32 accumulate ----
    x = x_ref[...]                                         # (bb*L, E) bf16
    qkv = jnp.dot(x, wqkv_ref[...],
                  preferred_element_type=jnp.float32)      # (bb*L, 3E) f32
    qkv = qkv + bqkv_ref[...]                              # f32 bias add

    q = qkv[:, 0:E] * scale                                # scale q in f32
    k = qkv[:, E:2 * E]
    v = qkv[:, 2 * E:3 * E]

    # ---- per-head attention: batched MXU matmuls, lane-dense score tiles ----
    # Static (unrolled) head loop; each head's intermediates die inside the
    # iteration, keeping the live set small.
    for h in range(H):
        sl = slice(h * Dh, (h + 1) * Dh)                   # static lane slice
        qh = q[:, sl].reshape(bb, L, Dh).astype(jnp.bfloat16)   # free major split
        kh = k[:, sl].reshape(bb, L, Dh).astype(jnp.bfloat16)
        vh = v[:, sl].reshape(bb, L, Dh).astype(jnp.bfloat16)

        # scores: (bb, Lq, Lk) -- key axis last => lane-dense reductions/stores
        s = jnp.einsum('bqd,bkd->bqk', qh, kh,
                       preferred_element_type=jnp.float32)

        # softmax over keys, all in f32 (EUP exp + approx reciprocal)
        m = jnp.max(s, axis=-1, keepdims=True)
        p = jnp.exp(s - m)
        denom = jnp.sum(p, axis=-1, keepdims=True)
        p = p * pl.reciprocal(denom, approx=True)

        # context: P @ V on the MXU (bf16 in, f32 out)
        ctx_h = jnp.einsum('bqk,bkd->bqd', p.astype(jnp.bfloat16), vh,
                           preferred_element_type=jnp.float32)  # (bb, L, Dh)
        ctx_ref[:, sl] = ctx_h.reshape(bb * L, Dh)         # free major merge

    # ---- output projection (pre-transposed bf16 weight, f32 accumulate) ----
    ctx = ctx_ref[...].astype(jnp.bfloat16)                # (bb*L, E)
    out = jnp.dot(ctx, wo_ref[...], preferred_element_type=jnp.float32)
    out = out + bo_ref[...]
    o_ref[...] = out.astype(o_ref.dtype)


def mhsa_pallas(x, in_proj_weight, in_proj_bias, out_proj_weight, out_proj_bias,
                *, num_heads=NUM_HEADS, batch_tile=None):
    """x: (B, L, E) float32; weights follow torch.nn.MultiheadAttention layout.

    batch_tile: batches per grid step.  Default B//2 so there are >= 2 grid
    steps: DMA pipelining gets overlap and the "parallel" grid axis occupies
    both TensorCores on v7x.
    """
    B, L, E = x.shape
    assert E % num_heads == 0
    if batch_tile is None:
        batch_tile = max(1, B // 2)
        while B % batch_tile:
            batch_tile -= 1
    assert B % batch_tile == 0

    # Traced (outside-kernel) weight prep: fuse QKV, pre-transpose, pre-cast.
    w_qkv = in_proj_weight.T.astype(jnp.bfloat16)      # (E, 3E): x @ w_qkv -> [q|k|v]
    b_qkv = in_proj_bias.reshape(1, 3 * E).astype(jnp.float32)
    w_o = out_proj_weight.T.astype(jnp.bfloat16)       # (E, E)
    b_o = out_proj_bias.reshape(1, E).astype(jnp.float32)
    x2 = x.reshape(B * L, E).astype(jnp.bfloat16)      # flat bf16 slab

    rows = batch_tile * L
    kernel = functools.partial(_mhsa_kernel, bb=batch_tile, L=L, H=num_heads)
    full = lambda i: (0, 0)

    # Explicit VMEM budget from the chosen tiles (double-buffered x/out tiles +
    # weights + ctx scratch), generous headroom; capped at 48 MiB so it also
    # fits v7x's 64 MiB physical VMEM (raise on v5e/v6e if tiles grow).
    x_tile = rows * E * 2                       # bf16
    out_tile = rows * E * 4                     # f32
    w_bytes = (E * 3 * E + E * E) * 2 + (3 * E + E) * 4
    scratch_bytes = rows * E * 4
    est = 2 * (x_tile + out_tile) + 2 * w_bytes + scratch_bytes
    vmem_limit = int(min(48 << 20, max(32 << 20, 4 * est)))

    out2 = pl.pallas_call(
        kernel,
        out_shape=jax.ShapeDtypeStruct((B * L, E), jnp.float32),
        grid_spec=pltpu.PrefetchScalarGridSpec(
            num_scalar_prefetch=0,
            grid=(B // batch_tile,),
            in_specs=[pl.BlockSpec((rows, E), lambda i: (i, 0)),
                      pl.BlockSpec((E, 3 * E), full),
                      pl.BlockSpec((1, 3 * E), full),
                      pl.BlockSpec((E, E), full),
                      pl.BlockSpec((1, E), full)],
            out_specs=pl.BlockSpec((rows, E), lambda i: (i, 0)),
            scratch_shapes=[pltpu.VMEM((rows, E), jnp.float32)],
        ),
        compiler_params=pltpu.CompilerParams(
            dimension_semantics=("parallel",),
            vmem_limit_bytes=vmem_limit),
    )(x2, w_qkv, b_qkv, w_o, b_o)
    return out2.reshape(B, L, E).astype(x.dtype)


def mhsa_reference(x, in_proj_weight, in_proj_bias, out_proj_weight, out_proj_bias):
    B, L, E = x.shape
    H = NUM_HEADS
    Dh = E // H
    qkv = jnp.einsum('ble,fe->blf', x, in_proj_weight) + in_proj_bias
    q, k, v = jnp.split(qkv, 3, axis=-1)

    def heads(t):
        return t.reshape(B, L, H, Dh).transpose(0, 2, 1, 3)

    q, k, v = heads(q), heads(k), heads(v)
    s = jnp.einsum('bhld,bhmd->bhlm', q, k) / math.sqrt(Dh)
    p = jax.nn.softmax(s, axis=-1)
    ctx = jnp.einsum('bhlm,bhmd->bhld', p, v)
    ctx = ctx.transpose(0, 2, 1, 3).reshape(B, L, E)
    return jnp.einsum('ble,fe->blf', ctx, out_proj_weight) + out_proj_bias


if __name__ == "__main__":
    B, L, E = 2, 8, 32   # hidden_size=32, 8 heads -> head_dim=4
    key = jax.random.PRNGKey(0)
    kx, kw1, kb1, kw2, kb2 = jax.random.split(key, 5)

    x = jax.random.normal(kx, (B, L, E), dtype=jnp.float32)
    # Deterministic synthetic parameters (shapes match nn.MultiheadAttention)
    in_proj_weight = jax.random.normal(kw1, (3 * E, E), dtype=jnp.float32) * 0.1
    in_proj_bias = jax.random.normal(kb1, (3 * E,), dtype=jnp.float32) * 0.1
    out_proj_weight = jax.random.normal(kw2, (E, E), dtype=jnp.float32) * 0.1
    out_proj_bias = jax.random.normal(kb2, (E,), dtype=jnp.float32) * 0.1

    out = mhsa_pallas(x, in_proj_weight, in_proj_bias,
                      out_proj_weight, out_proj_bias)
    out = jax.block_until_ready(out)

    ref = mhsa_reference(x, in_proj_weight, in_proj_bias,
                         out_proj_weight, out_proj_bias)
    # Tolerance covers bf16 MXU operands + approximate-reciprocal softmax denom.
    np.testing.assert_allclose(np.asarray(out), np.asarray(ref),
                               rtol=2e-2, atol=2e-2)
    print("KERNEL_OK")
</pallas_src>

<mosaic_0001>
module attributes {stable_mosaic.version = 11 : i64} {
  func.func @_mhsa_kernel(%arg0: i32, %arg1: memref<8x32xbf16, #tpu.memory_space<vmem>>, %arg2: memref<32x96xbf16, #tpu.memory_space<vmem>>, %arg3: memref<1x96xf32, #tpu.memory_space<vmem>>, %arg4: memref<32x32xbf16, #tpu.memory_space<vmem>>, %arg5: memref<1x32xf32, #tpu.memory_space<vmem>>, %arg6: memref<8x32xf32, #tpu.memory_space<vmem>>, %arg7: memref<8x32xf32, #tpu.memory_space<vmem>>) attributes {dimension_semantics = [#tpu.dimension_semantics<parallel>], iteration_bounds = array<i64: 2>, scalar_prefetch = 0 : i64, scratch_operands = 1 : i64, tpu.core_type = #tpu.core_type<tc>, window_params = [{transform_indices = @transform_0, window_bounds = array<i64: 8, 32>}, {pipeline_mode = #tpu.pipeline_mode<synchronous>, transform_indices = @transform_1, window_bounds = array<i64: 32, 96>}, {pipeline_mode = #tpu.pipeline_mode<synchronous>, transform_indices = @transform_2, window_bounds = array<i64: 1, 96>}, {pipeline_mode = #tpu.pipeline_mode<synchronous>, transform_indices = @transform_3, window_bounds = array<i64: 32, 32>}, {pipeline_mode = #tpu.pipeline_mode<synchronous>, transform_indices = @transform_4, window_bounds = array<i64: 1, 32>}, {transform_indices = @transform_5, window_bounds = array<i64: 8, 32>}]} {
    %c0 = arith.constant 0 : index
    %c0_0 = arith.constant 0 : index
    %0 = vector.load %arg1[%c0, %c0_0] : memref<8x32xbf16, #tpu.memory_space<vmem>>, vector<8x32xbf16>
    %c0_1 = arith.constant 0 : index
    %c0_2 = arith.constant 0 : index
    %1 = vector.load %arg2[%c0_1, %c0_2] : memref<32x96xbf16, #tpu.memory_space<vmem>>, vector<32x96xbf16>
    %cst = arith.constant dense<0.000000e+00> : vector<8x96xf32>
    %2 = tpu.matmul %0, %1, %cst {dimension_numbers = #tpu.dot_dimension_numbers<[1], [0], [0], [1], [0, 0, 1, 1], [], []>} : vector<8x32xbf16>, vector<32x96xbf16>, vector<8x96xf32> -> vector<8x96xf32>
    %c0_3 = arith.constant 0 : index
    %c0_4 = arith.constant 0 : index
    %3 = vector.load %arg3[%c0_3, %c0_4] : memref<1x96xf32, #tpu.memory_space<vmem>>, vector<1x96xf32>
    %4 = vector.broadcast %3 : vector<1x96xf32> to vector<8x96xf32>
    %5 = arith.addf %2, %4 : vector<8x96xf32>
    %6 = vector.extract_strided_slice %5 {offsets = [0, 0], sizes = [8, 32], strides = [1, 1]} : vector<8x96xf32> to vector<8x32xf32>
    %cst_5 = arith.constant 5.000000e-01 : f32
    %7 = vector.broadcast %cst_5 : f32 to vector<8x32xf32>
    %8 = arith.mulf %6, %7 : vector<8x32xf32>
    %9 = vector.extract_strided_slice %5 {offsets = [0, 32], sizes = [8, 32], strides = [1, 1]} : vector<8x96xf32> to vector<8x32xf32>
    %10 = vector.extract_strided_slice %5 {offsets = [0, 64], sizes = [8, 32], strides = [1, 1]} : vector<8x96xf32> to vector<8x32xf32>
    %11 = vector.extract_strided_slice %8 {offsets = [0, 0], sizes = [8, 4], strides = [1, 1]} : vector<8x32xf32> to vector<8x4xf32>
    %12 = vector.shape_cast %11 : vector<8x4xf32> to vector<1x8x4xf32>
    %13 = arith.truncf %12 : vector<1x8x4xf32> to vector<1x8x4xbf16>
    %14 = vector.extract_strided_slice %9 {offsets = [0, 0], sizes = [8, 4], strides = [1, 1]} : vector<8x32xf32> to vector<8x4xf32>
    %15 = vector.shape_cast %14 : vector<8x4xf32> to vector<1x8x4xf32>
    %16 = arith.truncf %15 : vector<1x8x4xf32> to vector<1x8x4xbf16>
    %17 = vector.extract_strided_slice %10 {offsets = [0, 0], sizes = [8, 4], strides = [1, 1]} : vector<8x32xf32> to vector<8x4xf32>
    %18 = vector.shape_cast %17 : vector<8x4xf32> to vector<1x8x4xf32>
    %19 = arith.truncf %18 : vector<1x8x4xf32> to vector<1x8x4xbf16>
    "tpu.trace_start"() <{level = 10 : i32, message = "bqd,bkd->bqk"}> : () -> ()
    %cst_6 = arith.constant dense<0.000000e+00> : vector<1x8x8xf32>
    %20 = tpu.matmul %13, %16, %cst_6 {dimension_numbers = #tpu.dot_dimension_numbers<[2], [2], [1], [1], [0, 0, 0, 1, 1, 1], [0], [0]>} : vector<1x8x4xbf16>, vector<1x8x4xbf16>, vector<1x8x8xf32> -> vector<1x8x8xf32>
    "tpu.trace_stop"() : () -> ()
    %cst_7 = arith.constant dense<0xFF800000> : vector<1x8xf32>
    %21 = vector.multi_reduction <maximumf>, %20, %cst_7 [2] : vector<1x8x8xf32> to vector<1x8xf32>
    %22 = vector.shape_cast %21 : vector<1x8xf32> to vector<1x8x1xf32>
    %23 = vector.broadcast %22 : vector<1x8x1xf32> to vector<1x8x8xf32>
    %24 = arith.subf %20, %23 : vector<1x8x8xf32>
    %25 = math.exp %24 : vector<1x8x8xf32>
    %cst_8 = arith.constant dense<0.000000e+00> : vector<1x8xf32>
    %26 = vector.multi_reduction <add>, %25, %cst_8 [2] : vector<1x8x8xf32> to vector<1x8xf32>
    %27 = vector.shape_cast %26 : vector<1x8xf32> to vector<1x8x1xf32>
    %28 = tpu.reciprocal %27 {approx = true} : vector<1x8x1xf32> -> vector<1x8x1xf32>
    %29 = vector.broadcast %28 : vector<1x8x1xf32> to vector<1x8x8xf32>
    %30 = arith.mulf %25, %29 : vector<1x8x8xf32>
    %31 = arith.truncf %30 : vector<1x8x8xf32> to vector<1x8x8xbf16>
    "tpu.trace_start"() <{level = 10 : i32, message = "bqk,bkd->bqd"}> : () -> ()
    %cst_9 = arith.constant dense<0.000000e+00> : vector<1x8x4xf32>
    %32 = tpu.matmul %31, %19, %cst_9 {dimension_numbers = #tpu.dot_dimension_numbers<[2], [1], [1], [2], [0, 0, 0, 1, 1, 2], [0], [0]>} : vector<1x8x8xbf16>, vector<1x8x4xbf16>, vector<1x8x4xf32> -> vector<1x8x4xf32>
    "tpu.trace_stop"() : () -> ()
    %33 = vector.shape_cast %32 : vector<1x8x4xf32> to vector<8x4xf32>
    %c0_10 = arith.constant 0 : index
    %c0_11 = arith.constant 0 : index
    %34 = vector.load %arg7[%c0_10, %c0_11] : memref<8x32xf32, #tpu.memory_space<vmem>>, vector<8x4xf32>
    tpu.vector_store %arg7[%c0_10, %c0_11], %33 {strides = array<i32>} : memref<8x32xf32, #tpu.memory_space<vmem>>, vector<8x4xf32>,
    %35 = vector.extract_strided_slice %8 {offsets = [0, 4], sizes = [8, 4], strides = [1, 1]} : vector<8x32xf32> to vector<8x4xf32>
    %36 = vector.shape_cast %35 : vector<8x4xf32> to vector<1x8x4xf32>
    %37 = arith.truncf %36 : vector<1x8x4xf32> to vector<1x8x4xbf16>
    %38 = vector.extract_strided_slice %9 {offsets = [0, 4], sizes = [8, 4], strides = [1, 1]} : vector<8x32xf32> to vector<8x4xf32>
    %39 = vector.shape_cast %38 : vector<8x4xf32> to vector<1x8x4xf32>
    %40 = arith.truncf %39 : vector<1x8x4xf32> to vector<1x8x4xbf16>
    %41 = vector.extract_strided_slice %10 {offsets = [0, 4], sizes = [8, 4], strides = [1, 1]} : vector<8x32xf32> to vector<8x4xf32>
    %42 = vector.shape_cast %41 : vector<8x4xf32> to vector<1x8x4xf32>
    %43 = arith.truncf %42 : vector<1x8x4xf32> to vector<1x8x4xbf16>
    "tpu.trace_start"() <{level = 10 : i32, message = "bqd,bkd->bqk"}> : () -> ()
    %cst_12 = arith.constant dense<0.000000e+00> : vector<1x8x8xf32>
    %44 = tpu.matmul %37, %40, %cst_12 {dimension_numbers = #tpu.dot_dimension_numbers<[2], [2], [1], [1], [0, 0, 0, 1, 1, 1], [0], [0]>} : vector<1x8x4xbf16>, vector<1x8x4xbf16>, vector<1x8x8xf32> -> vector<1x8x8xf32>
    "tpu.trace_stop"() : () -> ()
    %cst_13 = arith.constant dense<0xFF800000> : vector<1x8xf32>
    %45 = vector.multi_reduction <maximumf>, %44, %cst_13 [2] : vector<1x8x8xf32> to vector<1x8xf32>
    %46 = vector.shape_cast %45 : vector<1x8xf32> to vector<1x8x1xf32>
    %47 = vector.broadcast %46 : vector<1x8x1xf32> to vector<1x8x8xf32>
    %48 = arith.subf %44, %47 : vector<1x8x8xf32>
    %49 = math.exp %48 : vector<1x8x8xf32>
    %cst_14 = arith.constant dense<0.000000e+00> : vector<1x8xf32>
    %50 = vector.multi_reduction <add>, %49, %cst_14 [2] : vector<1x8x8xf32> to vector<1x8xf32>
    %51 = vector.shape_cast %50 : vector<1x8xf32> to vector<1x8x1xf32>
    %52 = tpu.reciprocal %51 {approx = true} : vector<1x8x1xf32> -> vector<1x8x1xf32>
    %53 = vector.broadcast %52 : vector<1x8x1xf32> to vector<1x8x8xf32>
    %54 = arith.mulf %49, %53 : vector<1x8x8xf32>
    %55 = arith.truncf %54 : vector<1x8x8xf32> to vector<1x8x8xbf16>
    "tpu.trace_start"() <{level = 10 : i32, message = "bqk,bkd->bqd"}> : () -> ()
    %cst_15 = arith.constant dense<0.000000e+00> : vector<1x8x4xf32>
    %56 = tpu.matmul %55, %43, %cst_15 {dimension_numbers = #tpu.dot_dimension_numbers<[2], [1], [1], [2], [0, 0, 0, 1, 1, 2], [0], [0]>} : vector<1x8x8xbf16>, vector<1x8x4xbf16>, vector<1x8x4xf32> -> vector<1x8x4xf32>
    "tpu.trace_stop"() : () -> ()
    %57 = vector.shape_cast %56 : vector<1x8x4xf32> to vector<8x4xf32>
    %c0_16 = arith.constant 0 : index
    %c4 = arith.constant 4 : index
    %58 = vector.load %arg7[%c0_16, %c4] : memref<8x32xf32, #tpu.memory_space<vmem>>, vector<8x4xf32>
    tpu.vector_store %arg7[%c0_16, %c4], %57 {strides = array<i32>} : memref<8x32xf32, #tpu.memory_space<vmem>>, vector<8x4xf32>,
    %59 = vector.extract_strided_slice %8 {offsets = [0, 8], sizes = [8, 4], strides = [1, 1]} : vector<8x32xf32> to vector<8x4xf32>
    %60 = vector.shape_cast %59 : vector<8x4xf32> to vector<1x8x4xf32>
    %61 = arith.truncf %60 : vector<1x8x4xf32> to vector<1x8x4xbf16>
    %62 = vector.extract_strided_slice %9 {offsets = [0, 8], sizes = [8, 4], strides = [1, 1]} : vector<8x32xf32> to vector<8x4xf32>
    %63 = vector.shape_cast %62 : vector<8x4xf32> to vector<1x8x4xf32>
    %64 = arith.truncf %63 : vector<1x8x4xf32> to vector<1x8x4xbf16>
    %65 = vector.extract_strided_slice %10 {offsets = [0, 8], sizes = [8, 4], strides = [1, 1]} : vector<8x32xf32> to vector<8x4xf32>
    %66 = vector.shape_cast %65 : vector<8x4xf32> to vector<1x8x4xf32>
    %67 = arith.truncf %66 : vector<1x8x4xf32> to vector<1x8x4xbf16>
    "tpu.trace_start"() <{level = 10 : i32, message = "bqd,bkd->bqk"}> : () -> ()
    %cst_17 = arith.constant dense<0.000000e+00> : vector<1x8x8xf32>
    %68 = tpu.matmul %61, %64, %cst_17 {dimension_numbers = #tpu.dot_dimension_numbers<[2], [2], [1], [1], [0, 0, 0, 1, 1, 1], [0], [0]>} : vector<1x8x4xbf16>, vector<1x8x4xbf16>, vector<1x8x8xf32> -> vector<1x8x8xf32>
    "tpu.trace_stop"() : () -> ()
    %cst_18 = arith.constant dense<0xFF800000> : vector<1x8xf32>
    %69 = vector.multi_reduction <maximumf>, %68, %cst_18 [2] : vector<1x8x8xf32> to vector<1x8xf32>
    %70 = vector.shape_cast %69 : vector<1x8xf32> to vector<1x8x1xf32>
    %71 = vector.broadcast %70 : vector<1x8x1xf32> to vector<1x8x8xf32>
    %72 = arith.subf %68, %71 : vector<1x8x8xf32>
    %73 = math.exp %72 : vector<1x8x8xf32>
    %cst_19 = arith.constant dense<0.000000e+00> : vector<1x8xf32>
    %74 = vector.multi_reduction <add>, %73, %cst_19 [2] : vector<1x8x8xf32> to vector<1x8xf32>
    %75 = vector.shape_cast %74 : vector<1x8xf32> to vector<1x8x1xf32>
    %76 = tpu.reciprocal %75 {approx = true} : vector<1x8x1xf32> -> vector<1x8x1xf32>
    %77 = vector.broadcast %76 : vector<1x8x1xf32> to vector<1x8x8xf32>
    %78 = arith.mulf %73, %77 : vector<1x8x8xf32>
    %79 = arith.truncf %78 : vector<1x8x8xf32> to vector<1x8x8xbf16>
    "tpu.trace_start"() <{level = 10 : i32, message = "bqk,bkd->bqd"}> : () -> ()
    %cst_20 = arith.constant dense<0.000000e+00> : vector<1x8x4xf32>
    %80 = tpu.matmul %79, %67, %cst_20 {dimension_numbers = #tpu.dot_dimension_numbers<[2], [1], [1], [2], [0, 0, 0, 1, 1, 2], [0], [0]>} : vector<1x8x8xbf16>, vector<1x8x4xbf16>, vector<1x8x4xf32> -> vector<1x8x4xf32>
    "tpu.trace_stop"() : () -> ()
    %81 = vector.shape_cast %80 : vector<1x8x4xf32> to vector<8x4xf32>
    %c0_21 = arith.constant 0 : index
    %c8 = arith.constant 8 : index
    %82 = vector.load %arg7[%c0_21, %c8] : memref<8x32xf32, #tpu.memory_space<vmem>>, vector<8x4xf32>
    tpu.vector_store %arg7[%c0_21, %c8], %81 {strides = array<i32>} : memref<8x32xf32, #tpu.memory_space<vmem>>, vector<8x4xf32>,
    %83 = vector.extract_strided_slice %8 {offsets = [0, 12], sizes = [8, 4], strides = [1, 1]} : vector<8x32xf32> to vector<8x4xf32>
    %84 = vector.shape_cast %83 : vector<8x4xf32> to vector<1x8x4xf32>
    %85 = arith.truncf %84 : vector<1x8x4xf32> to vector<1x8x4xbf16>
    %86 = vector.extract_strided_slice %9 {offsets = [0, 12], sizes = [8, 4], strides = [1, 1]} : vector<8x32xf32> to vector<8x4xf32>
    %87 = vector.shape_cast %86 : vector<8x4xf32> to vector<1x8x4xf32>
    %88 = arith.truncf %87 : vector<1x8x4xf32> to vector<1x8x4xbf16>
    %89 = vector.extract_strided_slice %10 {offsets = [0, 12], sizes = [8, 4], strides = [1, 1]} : vector<8x32xf32> to vector<8x4xf32>
    %90 = vector.shape_cast %89 : vector<8x4xf32> to vector<1x8x4xf32>
    %91 = arith.truncf %90 : vector<1x8x4xf32> to vector<1x8x4xbf16>
    "tpu.trace_start"() <{level = 10 : i32, message = "bqd,bkd->bqk"}> : () -> ()
    %cst_22 = arith.constant dense<0.000000e+00> : vector<1x8x8xf32>
    %92 = tpu.matmul %85, %88, %cst_22 {dimension_numbers = #tpu.dot_dimension_numbers<[2], [2], [1], [1], [0, 0, 0, 1, 1, 1], [0], [0]>} : vector<1x8x4xbf16>, vector<1x8x4xbf16>, vector<1x8x8xf32> -> vector<1x8x8xf32>
    "tpu.trace_stop"() : () -> ()
    %cst_23 = arith.constant dense<0xFF800000> : vector<1x8xf32>
    %93 = vector.multi_reduction <maximumf>, %92, %cst_23 [2] : vector<1x8x8xf32> to vector<1x8xf32>
    %94 = vector.shape_cast %93 : vector<1x8xf32> to vector<1x8x1xf32>
    %95 = vector.broadcast %94 : vector<1x8x1xf32> to vector<1x8x8xf32>
    %96 = arith.subf %92, %95 : vector<1x8x8xf32>
    %97 = math.exp %96 : vector<1x8x8xf32>
    %cst_24 = arith.constant dense<0.000000e+00> : vector<1x8xf32>
    %98 = vector.multi_reduction <add>, %97, %cst_24 [2] : vector<1x8x8xf32> to vector<1x8xf32>
    %99 = vector.shape_cast %98 : vector<1x8xf32> to vector<1x8x1xf32>
    %100 = tpu.reciprocal %99 {approx = true} : vector<1x8x1xf32> -> vector<1x8x1xf32>
    %101 = vector.broadcast %100 : vector<1x8x1xf32> to vector<1x8x8xf32>
    %102 = arith.mulf %97, %101 : vector<1x8x8xf32>
    %103 = arith.truncf %102 : vector<1x8x8xf32> to vector<1x8x8xbf16>
    "tpu.trace_start"() <{level = 10 : i32, message = "bqk,bkd->bqd"}> : () -> ()
    %cst_25 = arith.constant dense<0.000000e+00> : vector<1x8x4xf32>
    %104 = tpu.matmul %103, %91, %cst_25 {dimension_numbers = #tpu.dot_dimension_numbers<[2], [1], [1], [2], [0, 0, 0, 1, 1, 2], [0], [0]>} : vector<1x8x8xbf16>, vector<1x8x4xbf16>, vector<1x8x4xf32> -> vector<1x8x4xf32>
    "tpu.trace_stop"() : () -> ()
    %105 = vector.shape_cast %104 : vector<1x8x4xf32> to vector<8x4xf32>
    %c0_26 = arith.constant 0 : index
    %c12 = arith.constant 12 : index
    %106 = vector.load %arg7[%c0_26, %c12] : memref<8x32xf32, #tpu.memory_space<vmem>>, vector<8x4xf32>
    tpu.vector_store %arg7[%c0_26, %c12], %105 {strides = array<i32>} : memref<8x32xf32, #tpu.memory_space<vmem>>, vector<8x4xf32>,
    %107 = vector.extract_strided_slice %8 {offsets = [0, 16], sizes = [8, 4], strides = [1, 1]} : vector<8x32xf32> to vector<8x4xf32>
    %108 = vector.shape_cast %107 : vector<8x4xf32> to vector<1x8x4xf32>
    %109 = arith.truncf %108 : vector<1x8x4xf32> to vector<1x8x4xbf16>
    %110 = vector.extract_strided_slice %9 {offsets = [0, 16], sizes = [8, 4], strides = [1, 1]} : vector<8x32xf32> to vector<8x4xf32>
    %111 = vector.shape_cast %110 : vector<8x4xf32> to vector<1x8x4xf32>
    %112 = arith.truncf %111 : vector<1x8x4xf32> to vector<1x8x4xbf16>
    %113 = vector.extract_strided_slice %10 {offsets = [0, 16], sizes = [8, 4], strides = [1, 1]} : vector<8x32xf32> to vector<8x4xf32>
    %114 = vector.shape_cast %113 : vector<8x4xf32> to vector<1x8x4xf32>
    %115 = arith.truncf %114 : vector<1x8x4xf32> to vector<1x8x4xbf16>
    "tpu.trace_start"() <{level = 10 : i32, message = "bqd,bkd->bqk"}> : () -> ()
    %cst_27 = arith.constant dense<0.000000e+00> : vector<1x8x8xf32>
    %116 = tpu.matmul %109, %112, %cst_27 {dimension_numbers = #tpu.dot_dimension_numbers<[2], [2], [1], [1], [0, 0, 0, 1, 1, 1], [0], [0]>} : vector<1x8x4xbf16>, vector<1x8x4xbf16>, vector<1x8x8xf32> -> vector<1x8x8xf32>
    "tpu.trace_stop"() : () -> ()
    %cst_28 = arith.constant dense<0xFF800000> : vector<1x8xf32>
    %117 = vector.multi_reduction <maximumf>, %116, %cst_28 [2] : vector<1x8x8xf32> to vector<1x8xf32>
    %118 = vector.shape_cast %117 : vector<1x8xf32> to vector<1x8x1xf32>
    %119 = vector.broadcast %118 : vector<1x8x1xf32> to vector<1x8x8xf32>
    %120 = arith.subf %116, %119 : vector<1x8x8xf32>
    %121 = math.exp %120 : vector<1x8x8xf32>
    %cst_29 = arith.constant dense<0.000000e+00> : vector<1x8xf32>
    %122 = vector.multi_reduction <add>, %121, %cst_29 [2] : vector<1x8x8xf32> to vector<1x8xf32>
    %123 = vector.shape_cast %122 : vector<1x8xf32> to vector<1x8x1xf32>
    %124 = tpu.reciprocal %123 {approx = true} : vector<1x8x1xf32> -> vector<1x8x1xf32>
    %125 = vector.broadcast %124 : vector<1x8x1xf32> to vector<1x8x8xf32>
    %126 = arith.mulf %121, %125 : vector<1x8x8xf32>
    %127 = arith.truncf %126 : vector<1x8x8xf32> to vector<1x8x8xbf16>
    "tpu.trace_start"() <{level = 10 : i32, message = "bqk,bkd->bqd"}> : () -> ()
    %cst_30 = arith.constant dense<0.000000e+00> : vector<1x8x4xf32>
    %128 = tpu.matmul %127, %115, %cst_30 {dimension_numbers = #tpu.dot_dimension_numbers<[2], [1], [1], [2], [0, 0, 0, 1, 1, 2], [0], [0]>} : vector<1x8x8xbf16>, vector<1x8x4xbf16>, vector<1x8x4xf32> -> vector<1x8x4xf32>
    "tpu.trace_stop"() : () -> ()
    %129 = vector.shape_cast %128 : vector<1x8x4xf32> to vector<8x4xf32>
    %c0_31 = arith.constant 0 : index
    %c16 = arith.constant 16 : index
    %130 = vector.load %arg7[%c0_31, %c16] : memref<8x32xf32, #tpu.memory_space<vmem>>, vector<8x4xf32>
    tpu.vector_store %arg7[%c0_31, %c16], %129 {strides = array<i32>} : memref<8x32xf32, #tpu.memory_space<vmem>>, vector<8x4xf32>,
    %131 = vector.extract_strided_slice %8 {offsets = [0, 20], sizes = [8, 4], strides = [1, 1]} : vector<8x32xf32> to vector<8x4xf32>
    %132 = vector.shape_cast %131 : vector<8x4xf32> to vector<1x8x4xf32>
    %133 = arith.truncf %132 : vector<1x8x4xf32> to vector<1x8x4xbf16>
    %134 = vector.extract_strided_slice %9 {offsets = [0, 20], sizes = [8, 4], strides = [1, 1]} : vector<8x32xf32> to vector<8x4xf32>
    %135 = vector.shape_cast %134 : vector<8x4xf32> to vector<1x8x4xf32>
    %136 = arith.truncf %135 : vector<1x8x4xf32> to vector<1x8x4xbf16>
    %137 = vector.extract_strided_slice %10 {offsets = [0, 20], sizes = [8, 4], strides = [1, 1]} : vector<8x32xf32> to vector<8x4xf32>
    %138 = vector.shape_cast %137 : vector<8x4xf32> to vector<1x8x4xf32>
    %139 = arith.truncf %138 : vector<1x8x4xf32> to vector<1x8x4xbf16>
    "tpu.trace_start"() <{level = 10 : i32, message = "bqd,bkd->bqk"}> : () -> ()
    %cst_32 = arith.constant dense<0.000000e+00> : vector<1x8x8xf32>
    %140 = tpu.matmul %133, %136, %cst_32 {dimension_numbers = #tpu.dot_dimension_numbers<[2], [2], [1], [1], [0, 0, 0, 1, 1, 1], [0], [0]>} : vector<1x8x4xbf16>, vector<1x8x4xbf16>, vector<1x8x8xf32> -> vector<1x8x8xf32>
    "tpu.trace_stop"() : () -> ()
    %cst_33 = arith.constant dense<0xFF800000> : vector<1x8xf32>
    %141 = vector.multi_reduction <maximumf>, %140, %cst_33 [2] : vector<1x8x8xf32> to vector<1x8xf32>
    %142 = vector.shape_cast %141 : vector<1x8xf32> to vector<1x8x1xf32>
    %143 = vector.broadcast %142 : vector<1x8x1xf32> to vector<1x8x8xf32>
    %144 = arith.subf %140, %143 : vector<1x8x8xf32>
    %145 = math.exp %144 : vector<1x8x8xf32>
    %cst_34 = arith.constant dense<0.000000e+00> : vector<1x8xf32>
    %146 = vector.multi_reduction <add>, %145, %cst_34 [2] : vector<1x8x8xf32> to vector<1x8xf32>
    %147 = vector.shape_cast %146 : vector<1x8xf32> to vector<1x8x1xf32>
    %148 = tpu.reciprocal %147 {approx = true} : vector<1x8x1xf32> -> vector<1x8x1xf32>
    %149 = vector.broadcast %148 : vector<1x8x1xf32> to vector<1x8x8xf32>
    %150 = arith.mulf %145, %149 : vector<1x8x8xf32>
    %151 = arith.truncf %150 : vector<1x8x8xf32> to vector<1x8x8xbf16>
    "tpu.trace_start"() <{level = 10 : i32, message = "bqk,bkd->bqd"}> : () -> ()
    %cst_35 = arith.constant dense<0.000000e+00> : vector<1x8x4xf32>
    %152 = tpu.matmul %151, %139, %cst_35 {dimension_numbers = #tpu.dot_dimension_numbers<[2], [1], [1], [2], [0, 0, 0, 1, 1, 2], [0], [0]>} : vector<1x8x8xbf16>, vector<1x8x4xbf16>, vector<1x8x4xf32> -> vector<1x8x4xf32>
    "tpu.trace_stop"() : () -> ()
    %153 = vector.shape_cast %152 : vector<1x8x4xf32> to vector<8x4xf32>
    %c0_36 = arith.constant 0 : index
    %c20 = arith.constant 20 : index
    %154 = vector.load %arg7[%c0_36, %c20] : memref<8x32xf32, #tpu.memory_space<vmem>>, vector<8x4xf32>
    tpu.vector_store %arg7[%c0_36, %c20], %153 {strides = array<i32>} : memref<8x32xf32, #tpu.memory_space<vmem>>, vector<8x4xf32>,
    %155 = vector.extract_strided_slice %8 {offsets = [0, 24], sizes = [8, 4], strides = [1, 1]} : vector<8x32xf32> to vector<8x4xf32>
    %156 = vector.shape_cast %155 : vector<8x4xf32> to vector<1x8x4xf32>
    %157 = arith.truncf %156 : vector<1x8x4xf32> to vector<1x8x4xbf16>
    %158 = vector.extract_strided_slice %9 {offsets = [0, 24], sizes = [8, 4], strides = [1, 1]} : vector<8x32xf32> to vector<8x4xf32>
    %159 = vector.shape_cast %158 : vector<8x4xf32> to vector<1x8x4xf32>
    %160 = arith.truncf %159 : vector<1x8x4xf32> to vector<1x8x4xbf16>
    %161 = vector.extract_strided_slice %10 {offsets = [0, 24], sizes = [8, 4], strides = [1, 1]} : vector<8x32xf32> to vector<8x4xf32>
    %162 = vector.shape_cast %161 : vector<8x4xf32> to vector<1x8x4xf32>
    %163 = arith.truncf %162 : vector<1x8x4xf32> to vector<1x8x4xbf16>
    "tpu.trace_start"() <{level = 10 : i32, message = "bqd,bkd->bqk"}> : () -> ()
    %cst_37 = arith.constant dense<0.000000e+00> : vector<1x8x8xf32>
    %164 = tpu.matmul %157, %160, %cst_37 {dimension_numbers = #tpu.dot_dimension_numbers<[2], [2], [1], [1], [0, 0, 0, 1, 1, 1], [0], [0]>} : vector<1x8x4xbf16>, vector<1x8x4xbf16>, vector<1x8x8xf32> -> vector<1x8x8xf32>
    "tpu.trace_stop"() : () -> ()
    %cst_38 = arith.constant dense<0xFF800000> : vector<1x8xf32>
    %165 = vector.multi_reduction <maximumf>, %164, %cst_38 [2] : vector<1x8x8xf32> to vector<1x8xf32>
    %166 = vector.shape_cast %165 : vector<1x8xf32> to vector<1x8x1xf32>
    %167 = vector.broadcast %166 : vector<1x8x1xf32> to vector<1x8x8xf32>
    %168 = arith.subf %164, %167 : vector<1x8x8xf32>
    %169 = math.exp %168 : vector<1x8x8xf32>
    %cst_39 = arith.constant dense<0.000000e+00> : vector<1x8xf32>
    %170 = vector.multi_reduction <add>, %169, %cst_39 [2] : vector<1x8x8xf32> to vector<1x8xf32>
    %171 = vector.shape_cast %170 : vector<1x8xf32> to vector<1x8x1xf32>
    %172 = tpu.reciprocal %171 {approx = true} : vector<1x8x1xf32> -> vector<1x8x1xf32>
    %173 = vector.broadcast %172 : vector<1x8x1xf32> to vector<1x8x8xf32>
    %174 = arith.mulf %169, %173 : vector<1x8x8xf32>
    %175 = arith.truncf %174 : vector<1x8x8xf32> to vector<1x8x8xbf16>
    "tpu.trace_start"() <{level = 10 : i32, message = "bqk,bkd->bqd"}> : () -> ()
    %cst_40 = arith.constant dense<0.000000e+00> : vector<1x8x4xf32>
    %176 = tpu.matmul %175, %163, %cst_40 {dimension_numbers = #tpu.dot_dimension_numbers<[2], [1], [1], [2], [0, 0, 0, 1, 1, 2], [0], [0]>} : vector<1x8x8xbf16>, vector<1x8x4xbf16>, vector<1x8x4xf32> -> vector<1x8x4xf32>
    "tpu.trace_stop"() : () -> ()
    %177 = vector.shape_cast %176 : vector<1x8x4xf32> to vector<8x4xf32>
    %c0_41 = arith.constant 0 : index
    %c24 = arith.constant 24 : index
    %178 = vector.load %arg7[%c0_41, %c24] : memref<8x32xf32, #tpu.memory_space<vmem>>, vector<8x4xf32>
    tpu.vector_store %arg7[%c0_41, %c24], %177 {strides = array<i32>} : memref<8x32xf32, #tpu.memory_space<vmem>>, vector<8x4xf32>,
    %179 = vector.extract_strided_slice %8 {offsets = [0, 28], sizes = [8, 4], strides = [1, 1]} : vector<8x32xf32> to vector<8x4xf32>
    %180 = vector.shape_cast %179 : vector<8x4xf32> to vector<1x8x4xf32>
    %181 = arith.truncf %180 : vector<1x8x4xf32> to vector<1x8x4xbf16>
    %182 = vector.extract_strided_slice %9 {offsets = [0, 28], sizes = [8, 4], strides = [1, 1]} : vector<8x32xf32> to vector<8x4xf32>
    %183 = vector.shape_cast %182 : vector<8x4xf32> to vector<1x8x4xf32>
    %184 = arith.truncf %183 : vector<1x8x4xf32> to vector<1x8x4xbf16>
    %185 = vector.extract_strided_slice %10 {offsets = [0, 28], sizes = [8, 4], strides = [1, 1]} : vector<8x32xf32> to vector<8x4xf32>
    %186 = vector.shape_cast %185 : vector<8x4xf32> to vector<1x8x4xf32>
    %187 = arith.truncf %186 : vector<1x8x4xf32> to vector<1x8x4xbf16>
    "tpu.trace_start"() <{level = 10 : i32, message = "bqd,bkd->bqk"}> : () -> ()
    %cst_42 = arith.constant dense<0.000000e+00> : vector<1x8x8xf32>
    %188 = tpu.matmul %181, %184, %cst_42 {dimension_numbers = #tpu.dot_dimension_numbers<[2], [2], [1], [1], [0, 0, 0, 1, 1, 1], [0], [0]>} : vector<1x8x4xbf16>, vector<1x8x4xbf16>, vector<1x8x8xf32> -> vector<1x8x8xf32>
    "tpu.trace_stop"() : () -> ()
    %cst_43 = arith.constant dense<0xFF800000> : vector<1x8xf32>
    %189 = vector.multi_reduction <maximumf>, %188, %cst_43 [2] : vector<1x8x8xf32> to vector<1x8xf32>
    %190 = vector.shape_cast %189 : vector<1x8xf32> to vector<1x8x1xf32>
    %191 = vector.broadcast %190 : vector<1x8x1xf32> to vector<1x8x8xf32>
    %192 = arith.subf %188, %191 : vector<1x8x8xf32>
    %193 = math.exp %192 : vector<1x8x8xf32>
    %cst_44 = arith.constant dense<0.000000e+00> : vector<1x8xf32>
    %194 = vector.multi_reduction <add>, %193, %cst_44 [2] : vector<1x8x8xf32> to vector<1x8xf32>
    %195 = vector.shape_cast %194 : vector<1x8xf32> to vector<1x8x1xf32>
    %196 = tpu.reciprocal %195 {approx = true} : vector<1x8x1xf32> -> vector<1x8x1xf32>
    %197 = vector.broadcast %196 : vector<1x8x1xf32> to vector<1x8x8xf32>
    %198 = arith.mulf %193, %197 : vector<1x8x8xf32>
    %199 = arith.truncf %198 : vector<1x8x8xf32> to vector<1x8x8xbf16>
    "tpu.trace_start"() <{level = 10 : i32, message = "bqk,bkd->bqd"}> : () -> ()
    %cst_45 = arith.constant dense<0.000000e+00> : vector<1x8x4xf32>
    %200 = tpu.matmul %199, %187, %cst_45 {dimension_numbers = #tpu.dot_dimension_numbers<[2], [1], [1], [2], [0, 0, 0, 1, 1, 2], [0], [0]>} : vector<1x8x8xbf16>, vector<1x8x4xbf16>, vector<1x8x4xf32> -> vector<1x8x4xf32>
    "tpu.trace_stop"() : () -> ()
    %201 = vector.shape_cast %200 : vector<1x8x4xf32> to vector<8x4xf32>
    %c0_46 = arith.constant 0 : index
    %c28 = arith.constant 28 : index
    %202 = vector.load %arg7[%c0_46, %c28] : memref<8x32xf32, #tpu.memory_space<vmem>>, vector<8x4xf32>
    tpu.vector_store %arg7[%c0_46, %c28], %201 {strides = array<i32>} : memref<8x32xf32, #tpu.memory_space<vmem>>, vector<8x4xf32>,
    %c0_47 = arith.constant 0 : index
    %c0_48 = arith.constant 0 : index
    %203 = vector.load %arg7[%c0_47, %c0_48] : memref<8x32xf32, #tpu.memory_space<vmem>>, vector<8x32xf32>
    %204 = arith.truncf %203 : vector<8x32xf32> to vector<8x32xbf16>
    %c0_49 = arith.constant 0 : index
    %c0_50 = arith.constant 0 : index
    %205 = vector.load %arg4[%c0_49, %c0_50] : memref<32x32xbf16, #tpu.memory_space<vmem>>, vector<32x32xbf16>
    %cst_51 = arith.constant dense<0.000000e+00> : vector<8x32xf32>
    %206 = tpu.matmul %204, %205, %cst_51 {dimension_numbers = #tpu.dot_dimension_numbers<[1], [0], [0], [1], [0, 0, 1, 1], [], []>} : vector<8x32xbf16>, vector<32x32xbf16>, vector<8x32xf32> -> vector<8x32xf32>
    %c0_52 = arith.constant 0 : index
    %c0_53 = arith.constant 0 : index
    %207 = vector.load %arg5[%c0_52, %c0_53] : memref<1x32xf32, #tpu.memory_space<vmem>>, vector<1x32xf32>
    %208 = vector.broadcast %207 : vector<1x32xf32> to vector<8x32xf32>
    %209 = arith.addf %206, %208 : vector<8x32xf32>
    %c0_54 = arith.constant 0 : index
    %c0_55 = arith.constant 0 : index
    %210 = vector.load %arg6[%c0_54, %c0_55] : memref<8x32xf32, #tpu.memory_space<vmem>>, vector<8x32xf32>
    tpu.vector_store %arg6[%c0_54, %c0_55], %209 {strides = array<i32>} : memref<8x32xf32, #tpu.memory_space<vmem>>, vector<8x32xf32>,
    return
  }
  func.func @transform_0(%arg0: i32) -> (i32, i32) {
    %c0_i32 = arith.constant 0 : i32
    %c0_i32_0 = arith.constant 0 : i32
    return %arg0, %c0_i32 : i32, i32
  }
  func.func @transform_1(%arg0: i32) -> (i32, i32) {
    %c0_i32 = arith.constant 0 : i32
    %c0_i32_0 = arith.constant 0 : i32
    %c0_i32_1 = arith.constant 0 : i32
    return %c0_i32, %c0_i32_0 : i32, i32
  }
  func.func @transform_2(%arg0: i32) -> (i32, i32) {
    %c0_i32 = arith.constant 0 : i32
    %c0_i32_0 = arith.constant 0 : i32
    %c0_i32_1 = arith.constant 0 : i32
    return %c0_i32, %c0_i32_0 : i32, i32
  }
  func.func @transform_3(%arg0: i32) -> (i32, i32) {
    %c0_i32 = arith.constant 0 : i32
    %c0_i32_0 = arith.constant 0 : i32
    %c0_i32_1 = arith.constant 0 : i32
    return %c0_i32, %c0_i32_0 : i32, i32
  }
  func.func @transform_4(%arg0: i32) -> (i32, i32) {
    %c0_i32 = arith.constant 0 : i32
    %c0_i32_0 = arith.constant 0 : i32
    %c0_i32_1 = arith.constant 0 : i32
    return %c0_i32, %c0_i32_0 : i32, i32
  }
  func.func @transform_5(%arg0: i32) -> (i32, i32) {
    %c0_i32 = arith.constant 0 : i32
    %c0_i32_0 = arith.constant 0 : i32
    return %arg0, %c0_i32 : i32, i32
  }
}

</mosaic_0001>

<llo_original>
// kernel: tpu_custom_call.1
$region0: #{tpu_custom_call.1}
  #allocation0 [shape = 'u32[]', space=smem, size = 0x4, offset = 0x4, fixed_abs, tag = 'smem constant byte address 0x4 - core index']
  #allocation1 [shape = 'u32[144,128]{1,0:T(1,128)}', space=vmem, size = 0x12000, scoped, tag = 'internal scratch']
  #allocation2 [shape = 'f32[8,32]{1,0:T(8,128)}', space=vmem, size = 0x1000, scoped, tag = 'scratch operand']
  %s0 = inlined_call_operand.hbm [shape: bf16[16,32], index: 0, kind: input, shape index: {}]
  %s1 = inlined_call_operand.hbm [shape: bf16[32,96], index: 1, kind: input, shape index: {}]
  %s2 = inlined_call_operand.vmem [shape: f32[1,96], index: 2, kind: input, shape index: {}]
  %s3 = inlined_call_operand.hbm [shape: bf16[32,32], index: 3, kind: input, shape index: {}]
  %s4 = inlined_call_operand.vmem [shape: f32[1,32], index: 4, kind: input, shape index: {}]
  %s5 = inlined_call_operand.hbm [shape: f32[16,32], index: 5, kind: output, shape index: {}]
  %s6 = sld [smem:[#allocation0]]
  $region65: #{tpu_custom_call.1} parent=0
    _
  %s8 = ssub.s32 1, %s6
  %s9 = scalar_select 0, %s8, %s6
  $region1: #{tpu_custom_call.1} parent=0
    #allocation3 [shape = 'u8[4096]{0}', space=vmem, size = 0x1000, scoped, tag = 'input window, operand 0']
    #allocation4 [shape = 's32[2]{0}', space=sflag, size = 0x8, scoped, tag = 'scoped memory for tpu_custom_call.1']
    #allocation5 [shape = 's32[2]{0}', space=sflag, size = 0x8, scoped, tag = 'scoped memory for tpu_custom_call.1']
    #allocation6 [shape = 'u8[8192]{0}', space=vmem, size = 0x2000, scoped, tag = 'input window, operand 1, single buffered']
    #allocation7 [shape = 's32[1]{0}', space=sflag, size = 0x4, scoped, tag = 'scoped memory for tpu_custom_call.1']
    #allocation8 [shape = 'u8[8192]{0}', space=vmem, size = 0x2000, scoped, tag = 'input window, operand 3, single buffered']
    #allocation9 [shape = 'u8[8192]{0}', space=vmem, size = 0x2000, scoped, tag = 'output window, operand 0']
    %10 = vsyncpa [#allocation4], 0
    %s11 = scalar_lea.sflag [#allocation4], 1
    %12 = vsyncpa %s11, 0
    %13 = vsyncpa [#allocation7], 0
    %14 = vsyncpa [#allocation5], 0
    %s15 = scalar_lea.sflag [#allocation5], 1
    %16 = vsyncpa %s15, 0
    loop: start=0, step=1, limit=4
    $region2: #{tpu_custom_call.1} parent=1 // loop_pre_header
      _
    $region3: #{tpu_custom_call.1} parent=1 // loop_header
      %s18 = sphi 0, %s22
      %p19 = scmp.ge.s32.totalorder %s18, 4
      %s28 = sphi 0, %s30
      %s31 = sphi 0, %s28
      %s32 = sphi 0, %s31
      %s48 = sphi 0, %s32
      %s52 = sphi 0, %s52
      %s54 = sphi 0, %s52
      %s55 = sphi 0, %s54
      %s69 = sphi 0, %s55
      %s73 = sphi 0, %s73
      %s75 = sphi 0, %s73
      %s76 = sphi 0, %s75
      %s90 = sphi 0, %s76
      %s94 = sphi 0, %s94
      %s96 = sphi 0, %s94
      %s97 = sphi 0, %s96
      %s111 = sphi 0, %s97
      %s115 = sphi 0, %s115
      %s117 = sphi 0, %s115
      %s118 = sphi 0, %s117
      %s132 = sphi 0, %s118
      %s138 = sphi 0, %s140
      %s141 = sphi 0, %s138
      %s142 = sphi 0, %s141
      %s158 = sphi 0, %s142
    $region4: #{tpu_custom_call.1} parent=1 // loop_header_branch
      %21 = sbr.rel (%p19) target = $region8
    $region5: #{tpu_custom_call.1} parent=1 // loop_body
      %s23 = ssub.s32 %s18, 1
      %s24 = ssub.s32 %s18, 2
      %s25 = sadd.s32 %s18, 1
      %s26 = ssub.s32 %s18, %s25
      %p27 = scmp.eq.s32.totalorder %s26, 0
      %s29 = sadd.s32 %s28, 1
      %s30 = scalar_select %p27, %s28, %s29
      %p33 = pneg %p27
      %p34 = scmp.eq.s32.totalorder %s18, 1
      %p35 = por %p33, %p34
      %p36 = scmp.ne.s32.totalorder %s28, %s31
      %p37 = scmp.eq.s32.totalorder %s18, 0
      %p38 = por %p36, %p37
      %p39 = scmp.ne.s32.totalorder %s28, %s31
      %p40 = scmp.eq.s32.totalorder %s23, 1
      %p41 = por %p39, %p40
      %p42 = scmp.ne.s32.totalorder %s31, %s32
      %p43 = scmp.eq.s32.totalorder %s23, 0
      %p44 = por %p42, %p43
      %p45 = scmp.ne.s32.totalorder %s31, %s32
      %p46 = scmp.eq.s32.totalorder %s24, 1
      %p47 = por %p45, %p46
      %p49 = scmp.ne.s32.totalorder %s32, %s48
      %p50 = scmp.eq.s32.totalorder %s24, 0
      %p51 = por %p49, %p50
      %s53 = sadd.s32 %s52, 1
      %p56 = scmp.eq.s32.totalorder %s18, 1
      %p57 = scmp.ne.s32.totalorder %s52, %s54
      %p58 = scmp.eq.s32.totalorder %s18, 0
      %p59 = por %p57, %p58
      %p60 = scmp.ne.s32.totalorder %s52, %s54
      %p61 = scmp.eq.s32.totalorder %s23, 1
      %p62 = por %p60, %p61
      %p63 = scmp.ne.s32.totalorder %s54, %s55
      %p64 = scmp.eq.s32.totalorder %s23, 0
      %p65 = por %p63, %p64
      %p66 = scmp.ne.s32.totalorder %s54, %s55
      %p67 = scmp.eq.s32.totalorder %s24, 1
      %p68 = por %p66, %p67
      %p70 = scmp.ne.s32.totalorder %s55, %s69
      %p71 = scmp.eq.s32.totalorder %s24, 0
      %p72 = por %p70, %p71
      %s74 = sadd.s32 %s73, 1
      %p77 = scmp.eq.s32.totalorder %s18, 1
      %p78 = scmp.ne.s32.totalorder %s73, %s75
      %p79 = scmp.eq.s32.totalorder %s18, 0
      %p80 = por %p78, %p79
      %p81 = scmp.ne.s32.totalorder %s73, %s75
      %p82 = scmp.eq.s32.totalorder %s23, 1
      %p83 = por %p81, %p82
      %p84 = scmp.ne.s32.totalorder %s75, %s76
      %p85 = scmp.eq.s32.totalorder %s23, 0
      %p86 = por %p84, %p85
      %p87 = scmp.ne.s32.totalorder %s75, %s76
      %p88 = scmp.eq.s32.totalorder %s24, 1
      %p89 = por %p87, %p88
      %p91 = scmp.ne.s32.totalorder %s76, %s90
      %p92 = scmp.eq.s32.totalorder %s24, 0
      %p93 = por %p91, %p92
      %s95 = sadd.s32 %s94, 1
      %p98 = scmp.eq.s32.totalorder %s18, 1
      %p99 = scmp.ne.s32.totalorder %s94, %s96
      %p100 = scmp.eq.s32.totalorder %s18, 0
      %p101 = por %p99, %p100
      %p102 = scmp.ne.s32.totalorder %s94, %s96
      %p103 = scmp.eq.s32.totalorder %s23, 1
      %p104 = por %p102, %p103
      %p105 = scmp.ne.s32.totalorder %s96, %s97
      %p106 = scmp.eq.s32.totalorder %s23, 0
      %p107 = por %p105, %p106
      %p108 = scmp.ne.s32.totalorder %s96, %s97
      %p109 = scmp.eq.s32.totalorder %s24, 1
      %p110 = por %p108, %p109
      %p112 = scmp.ne.s32.totalorder %s97, %s111
      %p113 = scmp.eq.s32.totalorder %s24, 0
      %p114 = por %p112, %p113
      %s116 = sadd.s32 %s115, 1
      %p119 = scmp.eq.s32.totalorder %s18, 1
      %p120 = scmp.ne.s32.totalorder %s115, %s117
      %p121 = scmp.eq.s32.totalorder %s18, 0
      %p122 = por %p120, %p121
      %p123 = scmp.ne.s32.totalorder %s115, %s117
      %p124 = scmp.eq.s32.totalorder %s23, 1
      %p125 = por %p123, %p124
      %p126 = scmp.ne.s32.totalorder %s117, %s118
      %p127 = scmp.eq.s32.totalorder %s23, 0
      %p128 = por %p126, %p127
      %p129 = scmp.ne.s32.totalorder %s117, %s118
      %p130 = scmp.eq.s32.totalorder %s24, 1
      %p131 = por %p129, %p130
      %p133 = scmp.ne.s32.totalorder %s118, %s132
      %p134 = scmp.eq.s32.totalorder %s24, 0
      %p135 = por %p133, %p134
      %s136 = ssub.s32 %s18, %s25
      %p137 = scmp.eq.s32.totalorder %s136, 0
      %s139 = sadd.s32 %s138, 1
      %s140 = scalar_select %p137, %s138, %s139
      %p143 = pneg %p137
      %p144 = scmp.eq.s32.totalorder %s18, 1
      %p145 = por %p143, %p144
      %p146 = scmp.ne.s32.totalorder %s138, %s141
      %p147 = scmp.eq.s32.totalorder %s18, 0
      %p148 = por %p146, %p147
      %p149 = scmp.ne.s32.totalorder %s138, %s141
      %p150 = scmp.eq.s32.totalorder %s23, 1
      %p151 = por %p149, %p150
      %p152 = scmp.ne.s32.totalorder %s141, %s142
      %p153 = scmp.eq.s32.totalorder %s23, 0
      %p154 = por %p152, %p153
      %p155 = scmp.ne.s32.totalorder %s141, %s142
      %p156 = scmp.eq.s32.totalorder %s24, 1
      %p157 = por %p155, %p156
      %p159 = scmp.ne.s32.totalorder %s142, %s158
      %p160 = scmp.eq.s32.totalorder %s24, 0
      %p161 = por %p159, %p160
      %p162 = scmp.le.s32.totalorder 1, %s18
      %p163 = scmp.lt.s32.totalorder %s18, 3
      %p164 = pnand %p162, %p163
      %p165 = pneg %p164
      // Predicated region
      $region9: #{tpu_custom_call.1} parent=5 // pred_check
        _
      $region10: #{tpu_custom_call.1} parent=5 // pred_check_branch
        %167 = sbr.rel (%p164) target = $region12
      $region11: #{tpu_custom_call.1} parent=5 // pred_region
        %s168 = ssub.s32 %s18, 1
        // Predicated region
        $region13: #{tpu_custom_call.1} parent=11 // pred_check
          %p169 = pneg %p65
        $region14: #{tpu_custom_call.1} parent=11 // pred_check_branch
          %171 = sbr.rel (%p169) target = $region16
        $region15: #{tpu_custom_call.1} parent=11 // pred_region
          %s173 = ssub.s32 256, 256
          %174 = vsyncadd [#allocation7], %s173
          %s175 = sshll.u32 [#allocation6], 4
          %s176 = int_to_ptr.vmem [resolvable:$true] %s175
          %181 = dma.hbm_to_vmem [thread:$0]  %s1, 256, %s176, [#allocation7], 64, 64, 4
        $region16: #{tpu_custom_call.1} parent=11 // pred_fallthru
          _
        // Predicated region
        $region17: #{tpu_custom_call.1} parent=11 // pred_check
          %p182 = pneg %p86
        $region18: #{tpu_custom_call.1} parent=11 // pred_check_branch
          %184 = sbr.rel (%p182) target = $region20
        $region19: #{tpu_custom_call.1} parent=11 // pred_region
          _
        $region20: #{tpu_custom_call.1} parent=11 // pred_fallthru
          _
        // Predicated region
        $region21: #{tpu_custom_call.1} parent=11 // pred_check
          %p185 = pneg %p107
        $region22: #{tpu_custom_call.1} parent=11 // pred_check_branch
          %187 = sbr.rel (%p185) target = $region24
        $region23: #{tpu_custom_call.1} parent=11 // pred_region
          %s189 = ssub.s32 256, 256
          %190 = vsyncadd [#allocation7], %s189
          %s191 = sshll.u32 [#allocation8], 4
          %s192 = int_to_ptr.vmem [resolvable:$true] %s191
          %197 = dma.hbm_to_vmem [thread:$0]  %s3, 256, %s192, [#allocation7], 64, 64, 4
        $region24: #{tpu_custom_call.1} parent=11 // pred_fallthru
          _
        // Predicated region
        $region25: #{tpu_custom_call.1} parent=11 // pred_check
          %p198 = pneg %p128
        $region26: #{tpu_custom_call.1} parent=11 // pred_check_branch
          %200 = sbr.rel (%p198) target = $region28
        $region27: #{tpu_custom_call.1} parent=11 // pred_region
          _
        $region28: #{tpu_custom_call.1} parent=11 // pred_fallthru
          _
      $region12: #{tpu_custom_call.1} parent=5 // pred_fallthru
        _
      %p201 = scmp.lt.s32.totalorder %s18, 2
      // Predicated region
      $region29: #{tpu_custom_call.1} parent=5 // pred_check
        %p202 = pneg %p201
      $region30: #{tpu_custom_call.1} parent=5 // pred_check_branch
        %204 = sbr.rel (%p202) target = $region32
      $region31: #{tpu_custom_call.1} parent=5 // pred_region
        // Predicated region
        $region33: #{tpu_custom_call.1} parent=31 // pred_check
          %p205 = pneg %p38
        $region34: #{tpu_custom_call.1} parent=31 // pred_check_branch
          %207 = sbr.rel (%p205) target = $region36
        $region35: #{tpu_custom_call.1} parent=31 // pred_region
          %s208 = sand.u32 %s28, 1
          %s209 = scalar_lea.sflag [#allocation4], %s208
          %s210 = sand.u32 %s28, 1
          %s211 = smul.addr %s210, 4
          %s212 = scalar_lea.vmem [#allocation3], %s211
          %s214 = ssub.s32 64, 64
          %215 = vsyncadd %s209, %s214
          %s216 = smul.addr %s18, 64
          %s217 = scalar_lea.hbm %s0, %s216
          %s219 = sshll.u32 %s212, 4
          %s220 = int_to_ptr.vmem [resolvable:$true] %s219
          %222 = dma.hbm_to_vmem [thread:$0]  %s217, 64, %s220, %s209
        $region36: #{tpu_custom_call.1} parent=31 // pred_fallthru
          _
      $region32: #{tpu_custom_call.1} parent=5 // pred_fallthru
        _
      %p223 = scmp.le.s32.totalorder 1, %s18
      %p224 = scmp.lt.s32.totalorder %s18, 3
      %p225 = pnand %p223, %p224
      %p226 = pneg %p225
      // Predicated region
      $region37: #{tpu_custom_call.1} parent=5 // pred_check
        _
      $region38: #{tpu_custom_call.1} parent=5 // pred_check_branch
        %228 = sbr.rel (%p225) target = $region40
      $region39: #{tpu_custom_call.1} parent=5 // pred_region
        %s229 = ssub.s32 %s18, 1
        %s230 = sand.u32 %s31, 1
        %s231 = scalar_lea.sflag [#allocation4], %s230
        %s232 = sand.u32 %s31, 1
        %s233 = smul.addr %s232, 4
        %s234 = scalar_lea.vmem [#allocation3], %s233
        // Predicated region
        $region41: #{tpu_custom_call.1} parent=39 // pred_check
          %p235 = pneg %p44
        $region42: #{tpu_custom_call.1} parent=39 // pred_check_branch
          %237 = sbr.rel (%p235) target = $region44
        $region43: #{tpu_custom_call.1} parent=39 // pred_region
          %238 = dma.done %s231, 64
        $region44: #{tpu_custom_call.1} parent=39 // pred_fallthru
          _
        // Predicated region
        $region45: #{tpu_custom_call.1} parent=39 // pred_check
          %p239 = pneg %p65
        $region46: #{tpu_custom_call.1} parent=39 // pred_check_branch
          %241 = sbr.rel (%p239) target = $region48
        $region47: #{tpu_custom_call.1} parent=39 // pred_region
          %242 = dma.done [#allocation7], 256
        $region48: #{tpu_custom_call.1} parent=39 // pred_fallthru
          _
        // Predicated region
        $region49: #{tpu_custom_call.1} parent=39 // pred_check
          %p243 = pneg %p107
        $region50: #{tpu_custom_call.1} parent=39 // pred_check_branch
          %245 = sbr.rel (%p243) target = $region52
        $region51: #{tpu_custom_call.1} parent=39 // pred_region
          %246 = dma.done [#allocation7], 256
        $region52: #{tpu_custom_call.1} parent=39 // pred_fallthru
          _
        %s247 = sand.u32 %s31, 1
        %s248 = scalar_lea.sflag [#allocation4], %s247
        %s249 = sand.u32 %s31, 1
        %s250 = smul.addr %s249, 4
        %s251 = scalar_lea.vmem [#allocation3], %s250
        %p252 = pneg %p44
        %p253 = pneg %p41
        %p254 = pneg %p65
        %p255 = pneg %p62
        %p256 = pneg %p86
        %p257 = pneg %p83
        %p258 = pneg %p107
        %p259 = pneg %p104
        %p260 = pneg %p128
        %p261 = pneg %p125
        %p262 = pneg %p154
        %p263 = pneg %p151
        %s264 = sand.u32 %s141, 1
        %s265 = scalar_lea.sflag [#allocation5], %s264
        %s266 = sand.u32 %s141, 1
        %s267 = smul.addr %s266, 8
        %s268 = scalar_lea.vmem [#allocation9], %s267
        %v270 = vld [vmem:[%s234] sm:$0xf]
        %v271 = vld [vmem:[#allocation6] sm:$0xf]
        %v272 = vld [vmem:[#allocation6 + $0x4] sm:$0xf]
        %v273 = vld [vmem:[#allocation6 + $0x8] sm:$0xf]
        %v274 = vld [vmem:[#allocation6 + $0xc] sm:$0xf]
        %v275 = vld [vmem:[%s2] sm:$0x1]
        %v277 = vlaneseq
        %v278 = vshrl.u32 %v277, 7
        %v279 = vsub.s32 0, %v278
        %v280 = vrot.slane %v275, %v279
        %v286 = vunpack.c.l.b16 %v271
        %v287 = vunpack.c.l.b16 %v272
        %v288 = vunpack.c.l.b16 %v273
        %v289 = vunpack.c.l.b16 %v274
        %v290 = vpack.c.b16 %v287, %v286
        %v291 = vpack.c.b16 %v289, %v288
        %vm294 = vcmask 261120
        %v296 = vsel %vm294, %v270, 0
        %298 = vmatprep.subr.bf16.mxu0 0
        %299 = vmatpush1.bf16.msra.mxu0 %v290
        %300 = vmatprep.subr.bf16.mxu0 0
        %301 = vmatpush1.bf16.msra.mxu0 %v291
        %302 = vmatprep.subr.bf16.mxu0 0
        %303 = vmatpush1.bf16.msra.mxu0 0
        %304 = vmatprep.subr.bf16.mxu0 0
        %305 = vmatpush1.bf16.msra.mxu0 0
        %306 = vmatprep.subr.bf16.mxu0 0
        %307 = vmatpush1.bf16.msra.mxu0 0
        %308 = vmatprep.subr.bf16.mxu0 0
        %309 = vmatpush1.bf16.msra.mxu0 0
        %310 = vmatprep.subr.bf16.mxu0 0
        %311 = vmatpush1.bf16.msra.mxu0 0
        %312 = vmatprep.subr.bf16.mxu0 0
        %313 = vmatpush1.bf16.msra.mxu0 0
        %314 = vmatprep.subr.bf16.mxu0 0
        %315 = vmatpush1.bf16.msra.mxu0 0
        %316 = vmatprep.subr.bf16.mxu0 0
        %317 = vmatpush1.bf16.msra.mxu0 0
        %318 = vmatprep.subr.bf16.mxu0 0
        %319 = vmatpush1.bf16.msra.mxu0 0
        %320 = vmatprep.subr.bf16.mxu0 0
        %321 = vmatpush1.bf16.msra.mxu0 0
        %322 = vmatprep.subr.bf16.mxu0 0
        %323 = vmatpush1.bf16.msra.mxu0 0
        %324 = vmatprep.subr.bf16.mxu0 0
        %325 = vmatpush1.bf16.msra.mxu0 0
        %326 = vmatprep.subr.bf16.mxu0 0
        %327 = vmatpush1.bf16.msra.mxu0 0
        %328 = vmatprep.subr.bf16.mxu0 0
        %329 = vmatpush1.bf16.msra.mxu0 0
        %330 = vmatprep.mubr.bf16.mxu0 0
        %331 = vmatmul.mubr.bf16.gmra.mrb[0].mxu0 %v296
        %v332 = vpop.f32.mrb[0].mxu0
        %v333 = vadd.f32 %v280, %v332
        %v334 = vpop.f32.mrb[0].mxu0
        %v335 = vpop.f32.mrb[0].mxu0
        %v336 = vpop.f32.mrb[0].mxu0
        %337 = vdwg.mxu0
        %v338 = vmul.f32 %v333, 0.5
        %v339 = vpack.c.bf16 %v338, %v338
        %v340 = vpack.c.bf16 %v333, %v333
        %342 = vrot.lane.b32.xlu0 %v340, 96
        %v343 = vpop.permute.xlu0 %342
        %vm344 = vcmask 31744
        %v346 = vsel %vm344, %v339, 0
        %v349 = vsel %vm344, %v343, 0
        %351 = vmatprep.subr.bf16.mxu0 0
        %352 = vmatpush1.bf16.xpose.msra.mxu0 %v349
        %353 = vmatprep.subr.bf16.mxu0 0
        %354 = vmatpush1.bf16.xpose.msra.mxu0 0
        %355 = vmatprep.subr.bf16.mxu0 0
        %356 = vmatpush1.bf16.xpose.msra.mxu0 0
        %357 = vmatprep.subr.bf16.mxu0 0
        %358 = vmatpush1.bf16.xpose.msra.mxu0 0
        %359 = vmatprep.subr.bf16.mxu0 0
        %360 = vmatpush1.bf16.xpose.msra.mxu0 0
        %361 = vmatprep.subr.bf16.mxu0 0
        %362 = vmatpush1.bf16.xpose.msra.mxu0 0
        %363 = vmatprep.subr.bf16.mxu0 0
        %364 = vmatpush1.bf16.xpose.msra.mxu0 0
        %365 = vmatprep.subr.bf16.mxu0 0
        %366 = vmatpush1.bf16.xpose.msra.mxu0 0
        %367 = vmatprep.subr.bf16.mxu0 0
        %368 = vmatpush1.bf16.xpose.msra.mxu0 0
        %369 = vmatprep.subr.bf16.mxu0 0
        %370 = vmatpush1.bf16.xpose.msra.mxu0 0
        %371 = vmatprep.subr.bf16.mxu0 0
        %372 = vmatpush1.bf16.xpose.msra.mxu0 0
        %373 = vmatprep.subr.bf16.mxu0 0
        %374 = vmatpush1.bf16.xpose.msra.mxu0 0
        %375 = vmatprep.subr.bf16.mxu0 0
        %376 = vmatpush1.bf16.xpose.msra.mxu0 0
        %377 = vmatprep.subr.bf16.mxu0 0
        %378 = vmatpush1.bf16.xpose.msra.mxu0 0
        %379 = vmatprep.subr.bf16.mxu0 0
        %380 = vmatpush1.bf16.xpose.msra.mxu0 0
        %381 = vmatprep.subr.bf16.mxu0 0
        %382 = vmatpush1.bf16.xpose.msra.mxu0 0
        %383 = vmatprep.mubr.bf16.mxu0 0
        %384 = vmatmul.mubr.bf16.gmra.mrb[0].mxu0 %v346
        %v385 = vpop.f32.mrb[0].mxu0
        %v386 = vadd.f32 0.0, %v385
        %v387 = vpop.f32.mrb[0].mxu0
        %v388 = vpop.f32.mrb[0].mxu0
        %v389 = vpop.f32.mrb[0].mxu0
        %390 = vdwg.mxu0
        %vm391 = vcmask 64512
        %v392 = vsel %vm391, %v386, -inf
        %393 = vmax.xlane.f32.xlu0 %v392
        %v394 = vpop.xlane.xlu0 %393
        %v395 = vsub.f32 %v386, %v394
        %v396 = vmul.f32 %v395, 1.442695
        %v397 = vpow.pop %v396
        %v398 = vsel %vm391, %v397, 0.0
        %399 = vadd.xlane.f32.xlu0 %v398
        %v400 = vpop.xlane.xlu0 %399
        %v401 = vrcp.pop %v400
        %v402 = vmul.f32 %v397, %v401
        %v403 = vpack.c.bf16 %v402, %v402
        %404 = vrot.lane.b32.xlu0 %v340, 64
        %v405 = vpop.permute.xlu0 %404
        %v407 = vsel %vm391, %v403, 0
        %vm409 = vcmask 1043456
        %v411 = vsel %vm409, %v405, 0
        %413 = vmatprep.subr.bf16.mxu0 0
        %414 = vmatpush1.bf16.msra.mxu0 %v411
        %415 = vmatprep.subr.bf16.mxu0 0
        %416 = vmatpush1.bf16.msra.mxu0 0
        %417 = vmatprep.subr.bf16.mxu0 0
        %418 = vmatpush1.bf16.msra.mxu0 0
        %419 = vmatprep.subr.bf16.mxu0 0
        %420 = vmatpush1.bf16.msra.mxu0 0
        %421 = vmatprep.subr.bf16.mxu0 0
        %422 = vmatpush1.bf16.msra.mxu0 0
        %423 = vmatprep.subr.bf16.mxu0 0
        %424 = vmatpush1.bf16.msra.mxu0 0
        %425 = vmatprep.subr.bf16.mxu0 0
        %426 = vmatpush1.bf16.msra.mxu0 0
        %427 = vmatprep.subr.bf16.mxu0 0
        %428 = vmatpush1.bf16.msra.mxu0 0
        %429 = vmatprep.subr.bf16.mxu0 0
        %430 = vmatpush1.bf16.msra.mxu0 0
        %431 = vmatprep.subr.bf16.mxu0 0
        %432 = vmatpush1.bf16.msra.mxu0 0
        %433 = vmatprep.subr.bf16.mxu0 0
        %434 = vmatpush1.bf16.msra.mxu0 0
        %435 = vmatprep.subr.bf16.mxu0 0
        %436 = vmatpush1.bf16.msra.mxu0 0
        %437 = vmatprep.subr.bf16.mxu0 0
        %438 = vmatpush1.bf16.msra.mxu0 0
        %439 = vmatprep.subr.bf16.mxu0 0
        %440 = vmatpush1.bf16.msra.mxu0 0
        %441 = vmatprep.subr.bf16.mxu0 0
        %442 = vmatpush1.bf16.msra.mxu0 0
        %443 = vmatprep.subr.bf16.mxu0 0
        %444 = vmatpush1.bf16.msra.mxu0 0
        %445 = vmatprep.mubr.bf16.mxu0 0
        %446 = vmatmul.mubr.bf16.gmra.mrb[0].mxu0 %v407
        %v447 = vpop.f32.mrb[0].mxu0
        %v448 = vadd.f32 0.0, %v447
        %v449 = vpop.f32.mrb[0].mxu0
        %v450 = vpop.f32.mrb[0].mxu0
        %v451 = vpop.f32.mrb[0].mxu0
        %452 = vdwg.mxu0
        %453 = vst.msk [vmem:[#allocation2] sm:$0xff] %vm344, %v448
        %455 = vrot.lane.b32.xlu0 %v339, 124
        %v456 = vpop.permute.xlu0 %455
        %457 = vrot.lane.b32.xlu0 %v340, 92
        %v458 = vpop.permute.xlu0 %457
        %v460 = vsel %vm344, %v456, 0
        %v463 = vsel %vm344, %v458, 0
        %465 = vmatprep.subr.bf16.mxu0 0
        %466 = vmatpush1.bf16.xpose.msra.mxu0 %v463
        %467 = vmatprep.subr.bf16.mxu0 0
        %468 = vmatpush1.bf16.xpose.msra.mxu0 0
        %469 = vmatprep.subr.bf16.mxu0 0
        %470 = vmatpush1.bf16.xpose.msra.mxu0 0
        %471 = vmatprep.subr.bf16.mxu0 0
        %472 = vmatpush1.bf16.xpose.msra.mxu0 0
        %473 = vmatprep.subr.bf16.mxu0 0
        %474 = vmatpush1.bf16.xpose.msra.mxu0 0
        %475 = vmatprep.subr.bf16.mxu0 0
        %476 = vmatpush1.bf16.xpose.msra.mxu0 0
        %477 = vmatprep.subr.bf16.mxu0 0
        %478 = vmatpush1.bf16.xpose.msra.mxu0 0
        %479 = vmatprep.subr.bf16.mxu0 0
        %480 = vmatpush1.bf16.xpose.msra.mxu0 0
        %481 = vmatprep.subr.bf16.mxu0 0
        %482 = vmatpush1.bf16.xpose.msra.mxu0 0
        %483 = vmatprep.subr.bf16.mxu0 0
        %484 = vmatpush1.bf16.xpose.msra.mxu0 0
        %485 = vmatprep.subr.bf16.mxu0 0
        %486 = vmatpush1.bf16.xpose.msra.mxu0 0
        %487 = vmatprep.subr.bf16.mxu0 0
        %488 = vmatpush1.bf16.xpose.msra.mxu0 0
        %489 = vmatprep.subr.bf16.mxu0 0
        %490 = vmatpush1.bf16.xpose.msra.mxu0 0
        %491 = vmatprep.subr.bf16.mxu0 0
        %492 = vmatpush1.bf16.xpose.msra.mxu0 0
        %493 = vmatprep.subr.bf16.mxu0 0
        %494 = vmatpush1.bf16.xpose.msra.mxu0 0
        %495 = vmatprep.subr.bf16.mxu0 0
        %496 = vmatpush1.bf16.xpose.msra.mxu0 0
        %497 = vmatprep.mubr.bf16.mxu0 0
        %498 = vmatmul.mubr.bf16.gmra.mrb[0].mxu0 %v460
        %v499 = vpop.f32.mrb[0].mxu0
        %v500 = vadd.f32 0.0, %v499
        %v501 = vpop.f32.mrb[0].mxu0
        %v502 = vpop.f32.mrb[0].mxu0
        %v503 = vpop.f32.mrb[0].mxu0
        %504 = vdwg.mxu0
        %v505 = vsel %vm391, %v500, -inf
        %506 = vmax.xlane.f32.xlu0 %v505
        %v507 = vpop.xlane.xlu0 %506
        %v508 = vsub.f32 %v500, %v507
        %v509 = vmul.f32 %v508, 1.442695
        %v510 = vpow.pop %v509
        %v511 = vsel %vm391, %v510, 0.0
        %512 = vadd.xlane.f32.xlu0 %v511
        %v513 = vpop.xlane.xlu0 %512
        %v514 = vrcp.pop %v513
        %v515 = vmul.f32 %v510, %v514
        %v516 = vpack.c.bf16 %v515, %v515
        %517 = vrot.lane.b32.xlu0 %v340, 60
        %v518 = vpop.permute.xlu0 %517
        %v520 = vsel %vm391, %v516, 0
        %v523 = vsel %vm409, %v518, 0
        %525 = vmatprep.subr.bf16.mxu0 0
        %526 = vmatpush1.bf16.msra.mxu0 %v523
        %527 = vmatprep.subr.bf16.mxu0 0
        %528 = vmatpush1.bf16.msra.mxu0 0
        %529 = vmatprep.subr.bf16.mxu0 0
        %530 = vmatpush1.bf16.msra.mxu0 0
        %531 = vmatprep.subr.bf16.mxu0 0
        %532 = vmatpush1.bf16.msra.mxu0 0
        %533 = vmatprep.subr.bf16.mxu0 0
        %534 = vmatpush1.bf16.msra.mxu0 0
        %535 = vmatprep.subr.bf16.mxu0 0
        %536 = vmatpush1.bf16.msra.mxu0 0
        %537 = vmatprep.subr.bf16.mxu0 0
        %538 = vmatpush1.bf16.msra.mxu0 0
        %539 = vmatprep.subr.bf16.mxu0 0
        %540 = vmatpush1.bf16.msra.mxu0 0
        %541 = vmatprep.subr.bf16.mxu0 0
        %542 = vmatpush1.bf16.msra.mxu0 0
        %543 = vmatprep.subr.bf16.mxu0 0
        %544 = vmatpush1.bf16.msra.mxu0 0
        %545 = vmatprep.subr.bf16.mxu0 0
        %546 = vmatpush1.bf16.msra.mxu0 0
        %547 = vmatprep.subr.bf16.mxu0 0
        %548 = vmatpush1.bf16.msra.mxu0 0
        %549 = vmatprep.subr.bf16.mxu0 0
        %550 = vmatpush1.bf16.msra.mxu0 0
        %551 = vmatprep.subr.bf16.mxu0 0
        %552 = vmatpush1.bf16.msra.mxu0 0
        %553 = vmatprep.subr.bf16.mxu0 0
        %554 = vmatpush1.bf16.msra.mxu0 0
        %555 = vmatprep.subr.bf16.mxu0 0
        %556 = vmatpush1.bf16.msra.mxu0 0
        %557 = vmatprep.mubr.bf16.mxu0 0
        %558 = vmatmul.mubr.bf16.gmra.mrb[0].mxu0 %v520
        %v559 = vpop.f32.mrb[0].mxu0
        %v560 = vadd.f32 0.0, %v559
        %v561 = vpop.f32.mrb[0].mxu0
        %v562 = vpop.f32.mrb[0].mxu0
        %v563 = vpop.f32.mrb[0].mxu0
        %564 = vdwg.mxu0
        %566 = vrot.lane.b32.xlu0 %v560, 4
        %v567 = vpop.permute.xlu0 %566
        %vm569 = vcmask 64544
        %570 = vst.msk [vmem:[#allocation2] sm:$0xff] %vm569, %v567
        %571 = vrot.lane.b32.xlu0 %v339, 120
        %v572 = vpop.permute.xlu0 %571
        %573 = vrot.lane.b32.xlu0 %v340, 88
        %v574 = vpop.permute.xlu0 %573
        %v576 = vsel %vm344, %v572, 0
        %v579 = vsel %vm344, %v574, 0
        %581 = vmatprep.subr.bf16.mxu0 0
        %582 = vmatpush1.bf16.xpose.msra.mxu0 %v579
        %583 = vmatprep.subr.bf16.mxu0 0
        %584 = vmatpush1.bf16.xpose.msra.mxu0 0
        %585 = vmatprep.subr.bf16.mxu0 0
        %586 = vmatpush1.bf16.xpose.msra.mxu0 0
        %587 = vmatprep.subr.bf16.mxu0 0
        %588 = vmatpush1.bf16.xpose.msra.mxu0 0
        %589 = vmatprep.subr.bf16.mxu0 0
        %590 = vmatpush1.bf16.xpose.msra.mxu0 0
        %591 = vmatprep.subr.bf16.mxu0 0
        %592 = vmatpush1.bf16.xpose.msra.mxu0 0
        %593 = vmatprep.subr.bf16.mxu0 0
        %594 = vmatpush1.bf16.xpose.msra.mxu0 0
        %595 = vmatprep.subr.bf16.mxu0 0
        %596 = vmatpush1.bf16.xpose.msra.mxu0 0
        %597 = vmatprep.subr.bf16.mxu0 0
        %598 = vmatpush1.bf16.xpose.msra.mxu0 0
        %599 = vmatprep.subr.bf16.mxu0 0
        %600 = vmatpush1.bf16.xpose.msra.mxu0 0
        %601 = vmatprep.subr.bf16.mxu0 0
        %602 = vmatpush1.bf16.xpose.msra.mxu0 0
        %603 = vmatprep.subr.bf16.mxu0 0
        %604 = vmatpush1.bf16.xpose.msra.mxu0 0
        %605 = vmatprep.subr.bf16.mxu0 0
        %606 = vmatpush1.bf16.xpose.msra.mxu0 0
        %607 = vmatprep.subr.bf16.mxu0 0
        %608 = vmatpush1.bf16.xpose.msra.mxu0 0
        %609 = vmatprep.subr.bf16.mxu0 0
        %610 = vmatpush1.bf16.xpose.msra.mxu0 0
        %611 = vmatprep.subr.bf16.mxu0 0
        %612 = vmatpush1.bf16.xpose.msra.mxu0 0
        %613 = vmatprep.mubr.bf16.mxu0 0
        %614 = vmatmul.mubr.bf16.gmra.mrb[0].mxu0 %v576
        %v615 = vpop.f32.mrb[0].mxu0
        %v616 = vadd.f32 0.0, %v615
        %v617 = vpop.f32.mrb[0].mxu0
        %v618 = vpop.f32.mrb[0].mxu0
        %v619 = vpop.f32.mrb[0].mxu0
        %620 = vdwg.mxu0
        %v621 = vsel %vm391, %v616, -inf
        %622 = vmax.xlane.f32.xlu0 %v621
        %v623 = vpop.xlane.xlu0 %622
        %v624 = vsub.f32 %v616, %v623
        %v625 = vmul.f32 %v624, 1.442695
        %v626 = vpow.pop %v625
        %v627 = vsel %vm391, %v626, 0.0
        %628 = vadd.xlane.f32.xlu0 %v627
        %v629 = vpop.xlane.xlu0 %628
        %v630 = vrcp.pop %v629
        %v631 = vmul.f32 %v626, %v630
        %v632 = vpack.c.bf16 %v631, %v631
        %633 = vrot.lane.b32.xlu0 %v340, 56
        %v634 = vpop.permute.xlu0 %633
        %v636 = vsel %vm391, %v632, 0
        %v639 = vsel %vm409, %v634, 0
        %641 = vmatprep.subr.bf16.mxu0 0
        %642 = vmatpush1.bf16.msra.mxu0 %v639
        %643 = vmatprep.subr.bf16.mxu0 0
        %644 = vmatpush1.bf16.msra.mxu0 0
        %645 = vmatprep.subr.bf16.mxu0 0
        %646 = vmatpush1.bf16.msra.mxu0 0
        %647 = vmatprep.subr.bf16.mxu0 0
        %648 = vmatpush1.bf16.msra.mxu0 0
        %649 = vmatprep.subr.bf16.mxu0 0
        %650 = vmatpush1.bf16.msra.mxu0 0
        %651 = vmatprep.subr.bf16.mxu0 0
        %652 = vmatpush1.bf16.msra.mxu0 0
        %653 = vmatprep.subr.bf16.mxu0 0
        %654 = vmatpush1.bf16.msra.mxu0 0
        %655 = vmatprep.subr.bf16.mxu0 0
        %656 = vmatpush1.bf16.msra.mxu0 0
        %657 = vmatprep.subr.bf16.mxu0 0
        %658 = vmatpush1.bf16.msra.mxu0 0
        %659 = vmatprep.subr.bf16.mxu0 0
        %660 = vmatpush1.bf16.msra.mxu0 0
        %661 = vmatprep.subr.bf16.mxu0 0
        %662 = vmatpush1.bf16.msra.mxu0 0
        %663 = vmatprep.subr.bf16.mxu0 0
        %664 = vmatpush1.bf16.msra.mxu0 0
        %665 = vmatprep.subr.bf16.mxu0 0
        %666 = vmatpush1.bf16.msra.mxu0 0
        %667 = vmatprep.subr.bf16.mxu0 0
        %668 = vmatpush1.bf16.msra.mxu0 0
        %669 = vmatprep.subr.bf16.mxu0 0
        %670 = vmatpush1.bf16.msra.mxu0 0
        %671 = vmatprep.subr.bf16.mxu0 0
        %672 = vmatpush1.bf16.msra.mxu0 0
        %673 = vmatprep.mubr.bf16.mxu0 0
        %674 = vmatmul.mubr.bf16.gmra.mrb[0].mxu0 %v636
        %v675 = vpop.f32.mrb[0].mxu0
        %v676 = vadd.f32 0.0, %v675
        %v677 = vpop.f32.mrb[0].mxu0
        %v678 = vpop.f32.mrb[0].mxu0
        %v679 = vpop.f32.mrb[0].mxu0
        %680 = vdwg.mxu0
        %682 = vrot.lane.b32.xlu0 %v676, 8
        %v683 = vpop.permute.xlu0 %682
        %vm685 = vcmask 97344
        %686 = vst.msk [vmem:[#allocation2] sm:$0xff] %vm685, %v683
        %687 = vrot.lane.b32.xlu0 %v339, 116
        %v688 = vpop.permute.xlu0 %687
        %689 = vrot.lane.b32.xlu0 %v340, 84
        %v690 = vpop.permute.xlu0 %689
        %v692 = vsel %vm344, %v688, 0
        %v695 = vsel %vm344, %v690, 0
        %697 = vmatprep.subr.bf16.mxu0 0
        %698 = vmatpush1.bf16.xpose.msra.mxu0 %v695
        %699 = vmatprep.subr.bf16.mxu0 0
        %700 = vmatpush1.bf16.xpose.msra.mxu0 0
        %701 = vmatprep.subr.bf16.mxu0 0
        %702 = vmatpush1.bf16.xpose.msra.mxu0 0
        %703 = vmatprep.subr.bf16.mxu0 0
        %704 = vmatpush1.bf16.xpose.msra.mxu0 0
        %705 = vmatprep.subr.bf16.mxu0 0
        %706 = vmatpush1.bf16.xpose.msra.mxu0 0
        %707 = vmatprep.subr.bf16.mxu0 0
        %708 = vmatpush1.bf16.xpose.msra.mxu0 0
        %709 = vmatprep.subr.bf16.mxu0 0
        %710 = vmatpush1.bf16.xpose.msra.mxu0 0
        %711 = vmatprep.subr.bf16.mxu0 0
        %712 = vmatpush1.bf16.xpose.msra.mxu0 0
        %713 = vmatprep.subr.bf16.mxu0 0
        %714 = vmatpush1.bf16.xpose.msra.mxu0 0
        %715 = vmatprep.subr.bf16.mxu0 0
        %716 = vmatpush1.bf16.xpose.msra.mxu0 0
        %717 = vmatprep.subr.bf16.mxu0 0
        %718 = vmatpush1.bf16.xpose.msra.mxu0 0
        %719 = vmatprep.subr.bf16.mxu0 0
        %720 = vmatpush1.bf16.xpose.msra.mxu0 0
        %721 = vmatprep.subr.bf16.mxu0 0
        %722 = vmatpush1.bf16.xpose.msra.mxu0 0
        %723 = vmatprep.subr.bf16.mxu0 0
        %724 = vmatpush1.bf16.xpose.msra.mxu0 0
        %725 = vmatprep.subr.bf16.mxu0 0
        %726 = vmatpush1.bf16.xpose.msra.mxu0 0
        %727 = vmatprep.subr.bf16.mxu0 0
        %728 = vmatpush1.bf16.xpose.msra.mxu0 0
        %729 = vmatprep.mubr.bf16.mxu0 0
        %730 = vmatmul.mubr.bf16.gmra.mrb[0].mxu0 %v692
        %v731 = vpop.f32.mrb[0].mxu0
        %v732 = vadd.f32 0.0, %v731
        %v733 = vpop.f32.mrb[0].mxu0
        %v734 = vpop.f32.mrb[0].mxu0
        %v735 = vpop.f32.mrb[0].mxu0
        %736 = vdwg.mxu0
        %v737 = vsel %vm391, %v732, -inf
        %738 = vmax.xlane.f32.xlu0 %v737
        %v739 = vpop.xlane.xlu0 %738
        %v740 = vsub.f32 %v732, %v739
        %v741 = vmul.f32 %v740, 1.442695
        %v742 = vpow.pop %v741
        %v743 = vsel %vm391, %v742, 0.0
        %744 = vadd.xlane.f32.xlu0 %v743
        %v745 = vpop.xlane.xlu0 %744
        %v746 = vrcp.pop %v745
        %v747 = vmul.f32 %v742, %v746
        %v748 = vpack.c.bf16 %v747, %v747
        %749 = vrot.lane.b32.xlu0 %v340, 52
        %v750 = vpop.permute.xlu0 %749
        %v752 = vsel %vm391, %v748, 0
        %v755 = vsel %vm409, %v750, 0
        %757 = vmatprep.subr.bf16.mxu0 0
        %758 = vmatpush1.bf16.msra.mxu0 %v755
        %759 = vmatprep.subr.bf16.mxu0 0
        %760 = vmatpush1.bf16.msra.mxu0 0
        %761 = vmatprep.subr.bf16.mxu0 0
        %762 = vmatpush1.bf16.msra.mxu0 0
        %763 = vmatprep.subr.bf16.mxu0 0
        %764 = vmatpush1.bf16.msra.mxu0 0
        %765 = vmatprep.subr.bf16.mxu0 0
        %766 = vmatpush1.bf16.msra.mxu0 0
        %767 = vmatprep.subr.bf16.mxu0 0
        %768 = vmatpush1.bf16.msra.mxu0 0
        %769 = vmatprep.subr.bf16.mxu0 0
        %770 = vmatpush1.bf16.msra.mxu0 0
        %771 = vmatprep.subr.bf16.mxu0 0
        %772 = vmatpush1.bf16.msra.mxu0 0
        %773 = vmatprep.subr.bf16.mxu0 0
        %774 = vmatpush1.bf16.msra.mxu0 0
        %775 = vmatprep.subr.bf16.mxu0 0
        %776 = vmatpush1.bf16.msra.mxu0 0
        %777 = vmatprep.subr.bf16.mxu0 0
        %778 = vmatpush1.bf16.msra.mxu0 0
        %779 = vmatprep.subr.bf16.mxu0 0
        %780 = vmatpush1.bf16.msra.mxu0 0
        %781 = vmatprep.subr.bf16.mxu0 0
        %782 = vmatpush1.bf16.msra.mxu0 0
        %783 = vmatprep.subr.bf16.mxu0 0
        %784 = vmatpush1.bf16.msra.mxu0 0
        %785 = vmatprep.subr.bf16.mxu0 0
        %786 = vmatpush1.bf16.msra.mxu0 0
        %787 = vmatprep.subr.bf16.mxu0 0
        %788 = vmatpush1.bf16.msra.mxu0 0
        %789 = vmatprep.mubr.bf16.mxu0 0
        %790 = vmatmul.mubr.bf16.gmra.mrb[0].mxu0 %v752
        %v791 = vpop.f32.mrb[0].mxu0
        %v792 = vadd.f32 0.0, %v791
        %v793 = vpop.f32.mrb[0].mxu0
        %v794 = vpop.f32.mrb[0].mxu0
        %v795 = vpop.f32.mrb[0].mxu0
        %796 = vdwg.mxu0
        %798 = vrot.lane.b32.xlu0 %v792, 12
        %v799 = vpop.permute.xlu0 %798
        %vm801 = vcmask 130144
        %802 = vst.msk [vmem:[#allocation2] sm:$0xff] %vm801, %v799
        %803 = vrot.lane.b32.xlu0 %v339, 112
        %v804 = vpop.permute.xlu0 %803
        %805 = vrot.lane.b32.xlu0 %v340, 80
        %v806 = vpop.permute.xlu0 %805
        %v808 = vsel %vm344, %v804, 0
        %v811 = vsel %vm344, %v806, 0
        %813 = vmatprep.subr.bf16.mxu0 0
        %814 = vmatpush1.bf16.xpose.msra.mxu0 %v811
        %815 = vmatprep.subr.bf16.mxu0 0
        %816 = vmatpush1.bf16.xpose.msra.mxu0 0
        %817 = vmatprep.subr.bf16.mxu0 0
        %818 = vmatpush1.bf16.xpose.msra.mxu0 0
        %819 = vmatprep.subr.bf16.mxu0 0
        %820 = vmatpush1.bf16.xpose.msra.mxu0 0
        %821 = vmatprep.subr.bf16.mxu0 0
        %822 = vmatpush1.bf16.xpose.msra.mxu0 0
        %823 = vmatprep.subr.bf16.mxu0 0
        %824 = vmatpush1.bf16.xpose.msra.mxu0 0
        %825 = vmatprep.subr.bf16.mxu0 0
        %826 = vmatpush1.bf16.xpose.msra.mxu0 0
        %827 = vmatprep.subr.bf16.mxu0 0
        %828 = vmatpush1.bf16.xpose.msra.mxu0 0
        %829 = vmatprep.subr.bf16.mxu0 0
        %830 = vmatpush1.bf16.xpose.msra.mxu0 0
        %831 = vmatprep.subr.bf16.mxu0 0
        %832 = vmatpush1.bf16.xpose.msra.mxu0 0
        %833 = vmatprep.subr.bf16.mxu0 0
        %834 = vmatpush1.bf16.xpose.msra.mxu0 0
        %835 = vmatprep.subr.bf16.mxu0 0
        %836 = vmatpush1.bf16.xpose.msra.mxu0 0
        %837 = vmatprep.subr.bf16.mxu0 0
        %838 = vmatpush1.bf16.xpose.msra.mxu0 0
        %839 = vmatprep.subr.bf16.mxu0 0
        %840 = vmatpush1.bf16.xpose.msra.mxu0 0
        %841 = vmatprep.subr.bf16.mxu0 0
        %842 = vmatpush1.bf16.xpose.msra.mxu0 0
        %843 = vmatprep.subr.bf16.mxu0 0
        %844 = vmatpush1.bf16.xpose.msra.mxu0 0
        %845 = vmatprep.mubr.bf16.mxu0 0
        %846 = vmatmul.mubr.bf16.gmra.mrb[0].mxu0 %v808
        %v847 = vpop.f32.mrb[0].mxu0
        %v848 = vadd.f32 0.0, %v847
        %v849 = vpop.f32.mrb[0].mxu0
        %v850 = vpop.f32.mrb[0].mxu0
        %v851 = vpop.f32.mrb[0].mxu0
        %852 = vdwg.mxu0
        %v853 = vsel %vm391, %v848, -inf
        %854 = vmax.xlane.f32.xlu0 %v853
        %v855 = vpop.xlane.xlu0 %854
        %v856 = vsub.f32 %v848, %v855
        %v857 = vmul.f32 %v856, 1.442695
        %v858 = vpow.pop %v857
        %v859 = vsel %vm391, %v858, 0.0
        %860 = vadd.xlane.f32.xlu0 %v859
        %v861 = vpop.xlane.xlu0 %860
        %v862 = vrcp.pop %v861
        %v863 = vmul.f32 %v858, %v862
        %v864 = vpack.c.bf16 %v863, %v863
        %865 = vrot.lane.b32.xlu0 %v340, 48
        %v866 = vpop.permute.xlu0 %865
        %v868 = vsel %vm391, %v864, 0
        %v871 = vsel %vm409, %v866, 0
        %873 = vmatprep.subr.bf16.mxu0 0
        %874 = vmatpush1.bf16.msra.mxu0 %v871
        %875 = vmatprep.subr.bf16.mxu0 0
        %876 = vmatpush1.bf16.msra.mxu0 0
        %877 = vmatprep.subr.bf16.mxu0 0
        %878 = vmatpush1.bf16.msra.mxu0 0
        %879 = vmatprep.subr.bf16.mxu0 0
        %880 = vmatpush1.bf16.msra.mxu0 0
        %881 = vmatprep.subr.bf16.mxu0 0
        %882 = vmatpush1.bf16.msra.mxu0 0
        %883 = vmatprep.subr.bf16.mxu0 0
        %884 = vmatpush1.bf16.msra.mxu0 0
        %885 = vmatprep.subr.bf16.mxu0 0
        %886 = vmatpush1.bf16.msra.mxu0 0
        %887 = vmatprep.subr.bf16.mxu0 0
        %888 = vmatpush1.bf16.msra.mxu0 0
        %889 = vmatprep.subr.bf16.mxu0 0
        %890 = vmatpush1.bf16.msra.mxu0 0
        %891 = vmatprep.subr.bf16.mxu0 0
        %892 = vmatpush1.bf16.msra.mxu0 0
        %893 = vmatprep.subr.bf16.mxu0 0
        %894 = vmatpush1.bf16.msra.mxu0 0
        %895 = vmatprep.subr.bf16.mxu0 0
        %896 = vmatpush1.bf16.msra.mxu0 0
        %897 = vmatprep.subr.bf16.mxu0 0
        %898 = vmatpush1.bf16.msra.mxu0 0
        %899 = vmatprep.subr.bf16.mxu0 0
        %900 = vmatpush1.bf16.msra.mxu0 0
        %901 = vmatprep.subr.bf16.mxu0 0
        %902 = vmatpush1.bf16.msra.mxu0 0
        %903 = vmatprep.subr.bf16.mxu0 0
        %904 = vmatpush1.bf16.msra.mxu0 0
        %905 = vmatprep.mubr.bf16.mxu0 0
        %906 = vmatmul.mubr.bf16.gmra.mrb[0].mxu0 %v868
        %v907 = vpop.f32.mrb[0].mxu0
        %v908 = vadd.f32 0.0, %v907
        %v909 = vpop.f32.mrb[0].mxu0
        %v910 = vpop.f32.mrb[0].mxu0
        %v911 = vpop.f32.mrb[0].mxu0
        %912 = vdwg.mxu0
        %914 = vrot.lane.b32.xlu0 %v908, 16
        %v915 = vpop.permute.xlu0 %914
        %vm917 = vcmask 162944
        %918 = vst.msk [vmem:[#allocation2] sm:$0xff] %vm917, %v915
        %919 = vrot.lane.b32.xlu0 %v339, 108
        %v920 = vpop.permute.xlu0 %919
        %921 = vrot.lane.b32.xlu0 %v340, 76
        %v922 = vpop.permute.xlu0 %921
        %v924 = vsel %vm344, %v920, 0
        %v927 = vsel %vm344, %v922, 0
        %929 = vmatprep.subr.bf16.mxu0 0
        %930 = vmatpush1.bf16.xpose.msra.mxu0 %v927
        %931 = vmatprep.subr.bf16.mxu0 0
        %932 = vmatpush1.bf16.xpose.msra.mxu0 0
        %933 = vmatprep.subr.bf16.mxu0 0
        %934 = vmatpush1.bf16.xpose.msra.mxu0 0
        %935 = vmatprep.subr.bf16.mxu0 0
        %936 = vmatpush1.bf16.xpose.msra.mxu0 0
        %937 = vmatprep.subr.bf16.mxu0 0
        %938 = vmatpush1.bf16.xpose.msra.mxu0 0
        %939 = vmatprep.subr.bf16.mxu0 0
        %940 = vmatpush1.bf16.xpose.msra.mxu0 0
        %941 = vmatprep.subr.bf16.mxu0 0
        %942 = vmatpush1.bf16.xpose.msra.mxu0 0
        %943 = vmatprep.subr.bf16.mxu0 0
        %944 = vmatpush1.bf16.xpose.msra.mxu0 0
        %945 = vmatprep.subr.bf16.mxu0 0
        %946 = vmatpush1.bf16.xpose.msra.mxu0 0
        %947 = vmatprep.subr.bf16.mxu0 0
        %948 = vmatpush1.bf16.xpose.msra.mxu0 0
        %949 = vmatprep.subr.bf16.mxu0 0
        %950 = vmatpush1.bf16.xpose.msra.mxu0 0
        %951 = vmatprep.subr.bf16.mxu0 0
        %952 = vmatpush1.bf16.xpose.msra.mxu0 0
        %953 = vmatprep.subr.bf16.mxu0 0
        %954 = vmatpush1.bf16.xpose.msra.mxu0 0
        %955 = vmatprep.subr.bf16.mxu0 0
        %956 = vmatpush1.bf16.xpose.msra.mxu0 0
        %957 = vmatprep.subr.bf16.mxu0 0
        %958 = vmatpush1.bf16.xpose.msra.mxu0 0
        %959 = vmatprep.subr.bf16.mxu0 0
        %960 = vmatpush1.bf16.xpose.msra.mxu0 0
        %961 = vmatprep.mubr.bf16.mxu0 0
        %962 = vmatmul.mubr.bf16.gmra.mrb[0].mxu0 %v924
        %v963 = vpop.f32.mrb[0].mxu0
        %v964 = vadd.f32 0.0, %v963
        %v965 = vpop.f32.mrb[0].mxu0
        %v966 = vpop.f32.mrb[0].mxu0
        %v967 = vpop.f32.mrb[0].mxu0
        %968 = vdwg.mxu0
        %v969 = vsel %vm391, %v964, -inf
        %970 = vmax.xlane.f32.xlu0 %v969
        %v971 = vpop.xlane.xlu0 %970
        %v972 = vsub.f32 %v964, %v971
        %v973 = vmul.f32 %v972, 1.442695
        %v974 = vpow.pop %v973
        %v975 = vsel %vm391, %v974, 0.0
        %976 = vadd.xlane.f32.xlu0 %v975
        %v977 = vpop.xlane.xlu0 %976
        %v978 = vrcp.pop %v977
        %v979 = vmul.f32 %v974, %v978
        %v980 = vpack.c.bf16 %v979, %v979
        %981 = vrot.lane.b32.xlu0 %v340, 44
        %v982 = vpop.permute.xlu0 %981
        %v984 = vsel %vm391, %v980, 0
        %v987 = vsel %vm409, %v982, 0
        %989 = vmatprep.subr.bf16.mxu0 0
        %990 = vmatpush1.bf16.msra.mxu0 %v987
        %991 = vmatprep.subr.bf16.mxu0 0
        %992 = vmatpush1.bf16.msra.mxu0 0
        %993 = vmatprep.subr.bf16.mxu0 0
        %994 = vmatpush1.bf16.msra.mxu0 0
        %995 = vmatprep.subr.bf16.mxu0 0
        %996 = vmatpush1.bf16.msra.mxu0 0
        %997 = vmatprep.subr.bf16.mxu0 0
        %998 = vmatpush1.bf16.msra.mxu0 0
        %999 = vmatprep.subr.bf16.mxu0 0
        %1000 = vmatpush1.bf16.msra.mxu0 0
        %1001 = vmatprep.subr.bf16.mxu0 0
        %1002 = vmatpush1.bf16.msra.mxu0 0
        %1003 = vmatprep.subr.bf16.mxu0 0
        %1004 = vmatpush1.bf16.msra.mxu0 0
        %1005 = vmatprep.subr.bf16.mxu0 0
        %1006 = vmatpush1.bf16.msra.mxu0 0
        %1007 = vmatprep.subr.bf16.mxu0 0
        %1008 = vmatpush1.bf16.msra.mxu0 0
        %1009 = vmatprep.subr.bf16.mxu0 0
        %1010 = vmatpush1.bf16.msra.mxu0 0
        %1011 = vmatprep.subr.bf16.mxu0 0
        %1012 = vmatpush1.bf16.msra.mxu0 0
        %1013 = vmatprep.subr.bf16.mxu0 0
        %1014 = vmatpush1.bf16.msra.mxu0 0
        %1015 = vmatprep.subr.bf16.mxu0 0
        %1016 = vmatpush1.bf16.msra.mxu0 0
        %1017 = vmatprep.subr.bf16.mxu0 0
        %1018 = vmatpush1.bf16.msra.mxu0 0
        %1019 = vmatprep.subr.bf16.mxu0 0
        %1020 = vmatpush1.bf16.msra.mxu0 0
        %1021 = vmatprep.mubr.bf16.mxu0 0
        %1022 = vmatmul.mubr.bf16.gmra.mrb[0].mxu0 %v984
        %v1023 = vpop.f32.mrb[0].mxu0
        %v1024 = vadd.f32 0.0, %v1023
        %v1025 = vpop.f32.mrb[0].mxu0
        %v1026 = vpop.f32.mrb[0].mxu0
        %v1027 = vpop.f32.mrb[0].mxu0
        %1028 = vdwg.mxu0
        %1030 = vrot.lane.b32.xlu0 %v1024, 20
        %v1031 = vpop.permute.xlu0 %1030
        %vm1033 = vcmask 195744
        %1034 = vst.msk [vmem:[#allocation2] sm:$0xff] %vm1033, %v1031
        %1035 = vrot.lane.b32.xlu0 %v339, 104
        %v1036 = vpop.permute.xlu0 %1035
        %1037 = vrot.lane.b32.xlu0 %v340, 72
        %v1038 = vpop.permute.xlu0 %1037
        %v1040 = vsel %vm344, %v1036, 0
        %v1043 = vsel %vm344, %v1038, 0
        %1045 = vmatprep.subr.bf16.mxu0 0
        %1046 = vmatpush1.bf16.xpose.msra.mxu0 %v1043
        %1047 = vmatprep.subr.bf16.mxu0 0
        %1048 = vmatpush1.bf16.xpose.msra.mxu0 0
        %1049 = vmatprep.subr.bf16.mxu0 0
        %1050 = vmatpush1.bf16.xpose.msra.mxu0 0
        %1051 = vmatprep.subr.bf16.mxu0 0
        %1052 = vmatpush1.bf16.xpose.msra.mxu0 0
        %1053 = vmatprep.subr.bf16.mxu0 0
        %1054 = vmatpush1.bf16.xpose.msra.mxu0 0
        %1055 = vmatprep.subr.bf16.mxu0 0
        %1056 = vmatpush1.bf16.xpose.msra.mxu0 0
        %1057 = vmatprep.subr.bf16.mxu0 0
        %1058 = vmatpush1.bf16.xpose.msra.mxu0 0
        %1059 = vmatprep.subr.bf16.mxu0 0
        %1060 = vmatpush1.bf16.xpose.msra.mxu0 0
        %1061 = vmatprep.subr.bf16.mxu0 0
        %1062 = vmatpush1.bf16.xpose.msra.mxu0 0
        %1063 = vmatprep.subr.bf16.mxu0 0
        %1064 = vmatpush1.bf16.xpose.msra.mxu0 0
        %1065 = vmatprep.subr.bf16.mxu0 0
        %1066 = vmatpush1.bf16.xpose.msra.mxu0 0
        %1067 = vmatprep.subr.bf16.mxu0 0
        %1068 = vmatpush1.bf16.xpose.msra.mxu0 0
        %1069 = vmatprep.subr.bf16.mxu0 0
        %1070 = vmatpush1.bf16.xpose.msra.mxu0 0
        %1071 = vmatprep.subr.bf16.mxu0 0
        %1072 = vmatpush1.bf16.xpose.msra.mxu0 0
        %1073 = vmatprep.subr.bf16.mxu0 0
        %1074 = vmatpush1.bf16.xpose.msra.mxu0 0
        %1075 = vmatprep.subr.bf16.mxu0 0
        %1076 = vmatpush1.bf16.xpose.msra.mxu0 0
        %1077 = vmatprep.mubr.bf16.mxu0 0
        %1078 = vmatmul.mubr.bf16.gmra.mrb[0].mxu0 %v1040
        %v1079 = vpop.f32.mrb[0].mxu0
        %v1080 = vadd.f32 0.0, %v1079
        %v1081 = vpop.f32.mrb[0].mxu0
        %v1082 = vpop.f32.mrb[0].mxu0
        %v1083 = vpop.f32.mrb[0].mxu0
        %1084 = vdwg.mxu0
        %v1085 = vsel %vm391, %v1080, -inf
        %1086 = vmax.xlane.f32.xlu0 %v1085
        %v1087 = vpop.xlane.xlu0 %1086
        %v1088 = vsub.f32 %v1080, %v1087
        %v1089 = vmul.f32 %v1088, 1.442695
        %v1090 = vpow.pop %v1089
        %v1091 = vsel %vm391, %v1090, 0.0
        %1092 = vadd.xlane.f32.xlu0 %v1091
        %v1093 = vpop.xlane.xlu0 %1092
        %v1094 = vrcp.pop %v1093
        %v1095 = vmul.f32 %v1090, %v1094
        %v1096 = vpack.c.bf16 %v1095, %v1095
        %1097 = vrot.lane.b32.xlu0 %v340, 40
        %v1098 = vpop.permute.xlu0 %1097
        %v1100 = vsel %vm391, %v1096, 0
        %v1103 = vsel %vm409, %v1098, 0
        %1105 = vmatprep.subr.bf16.mxu0 0
        %1106 = vmatpush1.bf16.msra.mxu0 %v1103
        %1107 = vmatprep.subr.bf16.mxu0 0
        %1108 = vmatpush1.bf16.msra.mxu0 0
        %1109 = vmatprep.subr.bf16.mxu0 0
        %1110 = vmatpush1.bf16.msra.mxu0 0
        %1111 = vmatprep.subr.bf16.mxu0 0
        %1112 = vmatpush1.bf16.msra.mxu0 0
        %1113 = vmatprep.subr.bf16.mxu0 0
        %1114 = vmatpush1.bf16.msra.mxu0 0
        %1115 = vmatprep.subr.bf16.mxu0 0
        %1116 = vmatpush1.bf16.msra.mxu0 0
        %1117 = vmatprep.subr.bf16.mxu0 0
        %1118 = vmatpush1.bf16.msra.mxu0 0
        %1119 = vmatprep.subr.bf16.mxu0 0
        %1120 = vmatpush1.bf16.msra.mxu0 0
        %1121 = vmatprep.subr.bf16.mxu0 0
        %1122 = vmatpush1.bf16.msra.mxu0 0
        %1123 = vmatprep.subr.bf16.mxu0 0
        %1124 = vmatpush1.bf16.msra.mxu0 0
        %1125 = vmatprep.subr.bf16.mxu0 0
        %1126 = vmatpush1.bf16.msra.mxu0 0
        %1127 = vmatprep.subr.bf16.mxu0 0
        %1128 = vmatpush1.bf16.msra.mxu0 0
        %1129 = vmatprep.subr.bf16.mxu0 0
        %1130 = vmatpush1.bf16.msra.mxu0 0
        %1131 = vmatprep.subr.bf16.mxu0 0
        %1132 = vmatpush1.bf16.msra.mxu0 0
        %1133 = vmatprep.subr.bf16.mxu0 0
        %1134 = vmatpush1.bf16.msra.mxu0 0
        %1135 = vmatprep.subr.bf16.mxu0 0
        %1136 = vmatpush1.bf16.msra.mxu0 0
        %1137 = vmatprep.mubr.bf16.mxu0 0
        %1138 = vmatmul.mubr.bf16.gmra.mrb[0].mxu0 %v1100
        %v1139 = vpop.f32.mrb[0].mxu0
        %v1140 = vadd.f32 0.0, %v1139
        %v1141 = vpop.f32.mrb[0].mxu0
        %v1142 = vpop.f32.mrb[0].mxu0
        %v1143 = vpop.f32.mrb[0].mxu0
        %1144 = vdwg.mxu0
        %1146 = vrot.lane.b32.xlu0 %v1140, 24
        %v1147 = vpop.permute.xlu0 %1146
        %vm1149 = vcmask 228544
        %1150 = vst.msk [vmem:[#allocation2] sm:$0xff] %vm1149, %v1147
        %1151 = vrot.lane.b32.xlu0 %v339, 100
        %v1152 = vpop.permute.xlu0 %1151
        %1153 = vrot.lane.b32.xlu0 %v340, 68
        %v1154 = vpop.permute.xlu0 %1153
        %v1156 = vsel %vm344, %v1152, 0
        %v1159 = vsel %vm344, %v1154, 0
        %1161 = vmatprep.subr.bf16.mxu0 0
        %1162 = vmatpush1.bf16.xpose.msra.mxu0 %v1159
        %1163 = vmatprep.subr.bf16.mxu0 0
        %1164 = vmatpush1.bf16.xpose.msra.mxu0 0
        %1165 = vmatprep.subr.bf16.mxu0 0
        %1166 = vmatpush1.bf16.xpose.msra.mxu0 0
        %1167 = vmatprep.subr.bf16.mxu0 0
        %1168 = vmatpush1.bf16.xpose.msra.mxu0 0
        %1169 = vmatprep.subr.bf16.mxu0 0
        %1170 = vmatpush1.bf16.xpose.msra.mxu0 0
        %1171 = vmatprep.subr.bf16.mxu0 0
        %1172 = vmatpush1.bf16.xpose.msra.mxu0 0
        %1173 = vmatprep.subr.bf16.mxu0 0
        %1174 = vmatpush1.bf16.xpose.msra.mxu0 0
        %1175 = vmatprep.subr.bf16.mxu0 0
        %1176 = vmatpush1.bf16.xpose.msra.mxu0 0
        %1177 = vmatprep.subr.bf16.mxu0 0
        %1178 = vmatpush1.bf16.xpose.msra.mxu0 0
        %1179 = vmatprep.subr.bf16.mxu0 0
        %1180 = vmatpush1.bf16.xpose.msra.mxu0 0
        %1181 = vmatprep.subr.bf16.mxu0 0
        %1182 = vmatpush1.bf16.xpose.msra.mxu0 0
        %1183 = vmatprep.subr.bf16.mxu0 0
        %1184 = vmatpush1.bf16.xpose.msra.mxu0 0
        %1185 = vmatprep.subr.bf16.mxu0 0
        %1186 = vmatpush1.bf16.xpose.msra.mxu0 0
        %1187 = vmatprep.subr.bf16.mxu0 0
        %1188 = vmatpush1.bf16.xpose.msra.mxu0 0
        %1189 = vmatprep.subr.bf16.mxu0 0
        %1190 = vmatpush1.bf16.xpose.msra.mxu0 0
        %1191 = vmatprep.subr.bf16.mxu0 0
        %1192 = vmatpush1.bf16.xpose.msra.mxu0 0
        %1193 = vmatprep.mubr.bf16.mxu0 0
        %1194 = vmatmul.mubr.bf16.gmra.mrb[0].mxu0 %v1156
        %v1195 = vpop.f32.mrb[0].mxu0
        %v1196 = vadd.f32 0.0, %v1195
        %v1197 = vpop.f32.mrb[0].mxu0
        %v1198 = vpop.f32.mrb[0].mxu0
        %v1199 = vpop.f32.mrb[0].mxu0
        %1200 = vdwg.mxu0
        %v1201 = vsel %vm391, %v1196, -inf
        %1202 = vmax.xlane.f32.xlu0 %v1201
        %v1203 = vpop.xlane.xlu0 %1202
        %v1204 = vsub.f32 %v1196, %v1203
        %v1205 = vmul.f32 %v1204, 1.442695
        %v1206 = vpow.pop %v1205
        %v1207 = vsel %vm391, %v1206, 0.0
        %1208 = vadd.xlane.f32.xlu0 %v1207
        %v1209 = vpop.xlane.xlu0 %1208
        %v1210 = vrcp.pop %v1209
        %v1211 = vmul.f32 %v1206, %v1210
        %v1212 = vpack.c.bf16 %v1211, %v1211
        %1213 = vrot.lane.b32.xlu0 %v340, 36
        %v1214 = vpop.permute.xlu0 %1213
        %v1216 = vsel %vm391, %v1212, 0
        %v1219 = vsel %vm409, %v1214, 0
        %1221 = vmatprep.subr.bf16.mxu0 0
        %1222 = vmatpush1.bf16.msra.mxu0 %v1219
        %1223 = vmatprep.subr.bf16.mxu0 0
        %1224 = vmatpush1.bf16.msra.mxu0 0
        %1225 = vmatprep.subr.bf16.mxu0 0
        %1226 = vmatpush1.bf16.msra.mxu0 0
        %1227 = vmatprep.subr.bf16.mxu0 0
        %1228 = vmatpush1.bf16.msra.mxu0 0
        %1229 = vmatprep.subr.bf16.mxu0 0
        %1230 = vmatpush1.bf16.msra.mxu0 0
        %1231 = vmatprep.subr.bf16.mxu0 0
        %1232 = vmatpush1.bf16.msra.mxu0 0
        %1233 = vmatprep.subr.bf16.mxu0 0
        %1234 = vmatpush1.bf16.msra.mxu0 0
        %1235 = vmatprep.subr.bf16.mxu0 0
        %1236 = vmatpush1.bf16.msra.mxu0 0
        %1237 = vmatprep.subr.bf16.mxu0 0
        %1238 = vmatpush1.bf16.msra.mxu0 0
        %1239 = vmatprep.subr.bf16.mxu0 0
        %1240 = vmatpush1.bf16.msra.mxu0 0
        %1241 = vmatprep.subr.bf16.mxu0 0
        %1242 = vmatpush1.bf16.msra.mxu0 0
        %1243 = vmatprep.subr.bf16.mxu0 0
        %1244 = vmatpush1.bf16.msra.mxu0 0
        %1245 = vmatprep.subr.bf16.mxu0 0
        %1246 = vmatpush1.bf16.msra.mxu0 0
        %1247 = vmatprep.subr.bf16.mxu0 0
        %1248 = vmatpush1.bf16.msra.mxu0 0
        %1249 = vmatprep.subr.bf16.mxu0 0
        %1250 = vmatpush1.bf16.msra.mxu0 0
        %1251 = vmatprep.subr.bf16.mxu0 0
        %1252 = vmatpush1.bf16.msra.mxu0 0
        %1253 = vmatprep.mubr.bf16.mxu0 0
        %1254 = vmatmul.mubr.bf16.gmra.mrb[0].mxu0 %v1216
        %v1255 = vpop.f32.mrb[0].mxu0
        %v1256 = vadd.f32 0.0, %v1255
        %v1257 = vpop.f32.mrb[0].mxu0
        %v1258 = vpop.f32.mrb[0].mxu0
        %v1259 = vpop.f32.mrb[0].mxu0
        %1260 = vdwg.mxu0
        %1262 = vrot.lane.b32.xlu0 %v1256, 28
        %v1263 = vpop.permute.xlu0 %1262
        %vm1265 = vcmask 261344
        %1266 = vst.msk [vmem:[#allocation2] sm:$0xff] %vm1265, %v1263
        %v1267 = vld [vmem:[#allocation2] sm:$0xff]
        %v1268 = vpack.c.bf16 %v1267, %v1267
        %v1269 = vld [vmem:[#allocation8] sm:$0xf]
        %v1270 = vld [vmem:[#allocation8 + $0x4] sm:$0xf]
        %v1271 = vld [vmem:[#allocation8 + $0x8] sm:$0xf]
        %v1272 = vld [vmem:[#allocation8 + $0xc] sm:$0xf]
        %v1273 = vld [vmem:[%s4] sm:$0x1]
        %v1275 = vlaneseq
        %v1276 = vshrl.u32 %v1275, 7
        %v1277 = vsub.s32 0, %v1276
        %v1278 = vrot.slane %v1273, %v1277
        %v1284 = vunpack.c.l.b16 %v1269
        %v1285 = vunpack.c.l.b16 %v1270
        %v1286 = vunpack.c.l.b16 %v1271
        %v1287 = vunpack.c.l.b16 %v1272
        %v1288 = vpack.c.b16 %v1285, %v1284
        %v1289 = vpack.c.b16 %v1287, %v1286
        %v1293 = vsel %vm294, %v1268, 0
        %1295 = vmatprep.subr.bf16.mxu0 0
        %1296 = vmatpush1.bf16.msra.mxu0 %v1288
        %1297 = vmatprep.subr.bf16.mxu0 0
        %1298 = vmatpush1.bf16.msra.mxu0 %v1289
        %1299 = vmatprep.subr.bf16.mxu0 0
        %1300 = vmatpush1.bf16.msra.mxu0 0
        %1301 = vmatprep.subr.bf16.mxu0 0
        %1302 = vmatpush1.bf16.msra.mxu0 0
        %1303 = vmatprep.subr.bf16.mxu0 0
        %1304 = vmatpush1.bf16.msra.mxu0 0
        %1305 = vmatprep.subr.bf16.mxu0 0
        %1306 = vmatpush1.bf16.msra.mxu0 0
        %1307 = vmatprep.subr.bf16.mxu0 0
        %1308 = vmatpush1.bf16.msra.mxu0 0
        %1309 = vmatprep.subr.bf16.mxu0 0
        %1310 = vmatpush1.bf16.msra.mxu0 0
        %1311 = vmatprep.subr.bf16.mxu0 0
        %1312 = vmatpush1.bf16.msra.mxu0 0
        %1313 = vmatprep.subr.bf16.mxu0 0
        %1314 = vmatpush1.bf16.msra.mxu0 0
        %1315 = vmatprep.subr.bf16.mxu0 0
        %1316 = vmatpush1.bf16.msra.mxu0 0
        %1317 = vmatprep.subr.bf16.mxu0 0
        %1318 = vmatpush1.bf16.msra.mxu0 0
        %1319 = vmatprep.subr.bf16.mxu0 0
        %1320 = vmatpush1.bf16.msra.mxu0 0
        %1321 = vmatprep.subr.bf16.mxu0 0
        %1322 = vmatpush1.bf16.msra.mxu0 0
        %1323 = vmatprep.subr.bf16.mxu0 0
        %1324 = vmatpush1.bf16.msra.mxu0 0
        %1325 = vmatprep.subr.bf16.mxu0 0
        %1326 = vmatpush1.bf16.msra.mxu0 0
        %1327 = vmatprep.mubr.bf16.mxu0 0
        %1328 = vmatmul.mubr.bf16.gmra.mrb[0].mxu0 %v1293
        %v1329 = vpop.f32.mrb[0].mxu0
        %v1330 = vadd.f32 %v1278, %v1329
        %v1331 = vpop.f32.mrb[0].mxu0
        %v1332 = vpop.f32.mrb[0].mxu0
        %v1333 = vpop.f32.mrb[0].mxu0
        %1334 = vdwg.mxu0
        %1335 = vst.msk [vmem:[%s268] sm:$0xff] %vm294, %v1330
        %s1336 = sand.u32 %s141, 1
        %s1337 = scalar_lea.sflag [#allocation5], %s1336
        %s1338 = sand.u32 %s141, 1
        %s1339 = smul.addr %s1338, 8
        %s1340 = scalar_lea.vmem [#allocation9], %s1339
        // Predicated region
        $region53: #{tpu_custom_call.1} parent=39 // pred_check
          %p1341 = pneg %p151
        $region54: #{tpu_custom_call.1} parent=39 // pred_check_branch
          %1343 = sbr.rel (%p1341) target = $region56
        $region55: #{tpu_custom_call.1} parent=39 // pred_region
          %s1345 = ssub.s32 128, 128
          %1346 = vsyncadd %s1337, %s1345
          %s1347 = smul.addr %s23, 128
          %s1348 = scalar_lea.hbm %s5, %s1347
          %s1350 = sshll.u32 %s1340, 4
          %s1351 = int_to_ptr.vmem [resolvable:$true] %s1350
          %1353 = dma.vmem_to_hbm [thread:$0]  %s1351, 128, %s1348, %s1337
        $region56: #{tpu_custom_call.1} parent=39 // pred_fallthru
          _
      $region40: #{tpu_custom_call.1} parent=5 // pred_fallthru
        _
      %p1354 = scmp.le.s32.totalorder 2, %s18
      // Predicated region
      $region57: #{tpu_custom_call.1} parent=5 // pred_check
        %p1355 = pneg %p1354
      $region58: #{tpu_custom_call.1} parent=5 // pred_check_branch
        %1357 = sbr.rel (%p1355) target = $region60
      $region59: #{tpu_custom_call.1} parent=5 // pred_region
        %s1358 = ssub.s32 %s18, 2
        // Predicated region
        $region61: #{tpu_custom_call.1} parent=59 // pred_check
          %p1359 = pneg %p157
        $region62: #{tpu_custom_call.1} parent=59 // pred_check_branch
          %1361 = sbr.rel (%p1359) target = $region64
        $region63: #{tpu_custom_call.1} parent=59 // pred_region
          %s1362 = sand.u32 %s142, 1
          %s1363 = scalar_lea.sflag [#allocation5], %s1362
          %s1364 = sand.u32 %s142, 1
          %s1365 = smul.addr %s1364, 8
          %s1366 = scalar_lea.vmem [#allocation9], %s1365
          %1367 = dma.done %s1363, 128
        $region64: #{tpu_custom_call.1} parent=59 // pred_fallthru
          _
      $region60: #{tpu_custom_call.1} parent=5 // pred_fallthru
        _
    $region6: #{tpu_custom_call.1} parent=1 // loop_footer
      %s22 = sadd.s32 1, %s18
    $region7: #{tpu_custom_call.1} parent=1 // loop_footer_branch
      %17 = sbr.rel target = $region3
    $region8: #{tpu_custom_call.1} parent=1 // loop_exit
      _
    %1368 = vsyncpa [#allocation4], 1
    %s1369 = scalar_lea.sflag [#allocation4], 1
    %1370 = vsyncpa %s1369, 1
    %1371 = vsyncpa [#allocation7], 1
    %1372 = vsyncpa [#allocation5], 1
    %s1373 = scalar_lea.sflag [#allocation5], 1
    %1374 = vsyncpa %s1373, 1

</llo_original>
